<compile_context>
chip_gen: v7x
topology: tpu7x:2x2x1
jax: 0.10.0
libtpu: 0.0.40
codegen_flags: <defaults>
</compile_context>

<pallas_src>
import jax
import jax.numpy as jnp
from jax.experimental import pallas as pl
from jax.experimental.pallas import tpu as pltpu


def _round_up(x, m):
    return ((x + m - 1) // m) * m


def _vmem_capacity_bytes():
    """Physical VMEM of the attached TPU (fallback: v7x-safe 64 MiB)."""
    try:
        info = pltpu.get_tpu_info()
        cap = getattr(info, "vmem_capacity_bytes", None)
        if cap:
            return int(cap)
    except Exception:
        pass
    return 64 * 1024 * 1024


def _fixed_vmem_bytes(bt, tn, n_cls_p, b_p):
    """Non-tk-dependent VMEM residents (worst case: all double-buffered)."""
    return (bt * tn * 4                    # f32 accumulator scratch
            + 2 * tn * n_cls_p * 4         # W_fc block
            + 2 * b_p * bt * 4             # pooling matrix
            + 2 * tn * 4                   # visual bias slice
            + 2 * n_cls_p * 4              # classifier bias
            + 2 * b_p * n_cls_p * 4)       # output block


def _pick_tk(d_in, bt, tn, n_cls_p, b_p, vmem_bytes):
    """Largest K tile whose streaming working set fits ~60% of VMEM."""
    budget = int(0.6 * vmem_bytes)
    fixed = _fixed_vmem_bytes(bt, tn, n_cls_p, b_p)
    tk = 256
    for cand in (8192, 4096, 2048, 1024, 512, 256):
        stream = 2 * (bt * cand + cand * tn) * 2   # bf16 x + W_vis, dbl-buf
        if fixed + stream <= budget:
            tk = cand
            break
    # Never tile wider than the (padded) reduction axis itself.
    tk = min(tk, _round_up(max(d_in, 256), 256))
    return max(tk, 256)


def _vmem_limit_bytes(tk, bt, tn, n_cls_p, b_p, vmem_bytes):
    stream = 2 * (bt * tk + tk * tn) * 2
    need = stream + _fixed_vmem_bytes(bt, tn, n_cls_p, b_p) + (4 << 20)
    return int(min(max(need, 16 << 20), min(vmem_bytes, 128 << 20)))


# ---------------------------------------------------------------------------
# Fused kernel: visual matmul (K-tiled, bf16->f32 acc) + bias + temporal mean
#               pooling + dropout(eval=id) + classifier fc, all in VMEM.
# Grid = (n_n, n_k): n = n_emb column block (parallel, megacore-shardable),
#                    k = d_in tile (reduction, innermost).
# ---------------------------------------------------------------------------
def _fused_videoclip_kernel(x_ref, wv_ref, bv_ref, pool_ref, wf_ref, bf_ref,
                            o_ref, acc_ref):
    # x_ref   : (bt, tk)           bf16  K-tile of flattened frames
    # wv_ref  : (tk, tn)           bf16  (K, N) tile of visual weight
    # bv_ref  : (1, tn)            f32   visual bias slice for this N block
    # pool_ref: (b_p, bt)          f32   temporal mean-pooling matrix
    # wf_ref  : (tn, n_cls_p)      f32   classifier weight row block
    # bf_ref  : (1, n_cls_p)       f32   classifier bias
    # o_ref   : (1, b_p, n_cls_p)  f32   partial logits for this N block
    # acc_ref : (bt, tn)           f32   visual-matmul accumulator (VMEM)
    n = pl.program_id(0)
    k = pl.program_id(1)

    prod = jnp.dot(x_ref[...], wv_ref[...],
                   preferred_element_type=jnp.float32)

    @pl.when(k == 0)
    def _first():
        acc_ref[...] = prod            # first step: no zero-init + add

    @pl.when(k > 0)
    def _accum():
        acc_ref[...] += prod

    @pl.when(k == pl.num_programs(1) - 1)
    def _finalize():
        # Visual bias added exactly once per N block.
        emb = acc_ref[...] + bv_ref[...]                        # (bt, tn)
        # Temporal "meanP" fusion as an MXU contraction (no XLU reduce).
        fused = jnp.dot(pool_ref[...], emb,
                        preferred_element_type=jnp.float32)     # (b_p, tn)
        # nn.Dropout in eval mode is the identity -> no-op.
        partial = jnp.dot(fused, wf_ref[...],
                          preferred_element_type=jnp.float32)   # (b_p,n_cls_p)
        # Classifier bias contributes exactly once (only from N block 0);
        # the wrapper sums the partial logits over N blocks.
        partial = partial + (n == 0).astype(jnp.float32) * bf_ref[...]
        o_ref[0] = partial


# ---------------------------------------------------------------------------
# One-time weight preparation (hoisted out of the per-call forward path).
# ---------------------------------------------------------------------------
def prepare_params(params, *, bt, tn=256):
    """Pad + cast the static module weights once; pick tiling for this chip."""
    d_in, n_emb = params["w_vis"].shape
    n_cls = params["w_fc"].shape[1]

    LANE, SUB = 128, 8
    n_cls_p = _round_up(n_cls, LANE)
    tn = min(_round_up(tn, LANE), _round_up(n_emb, LANE))
    n_emb_p = _round_up(_round_up(n_emb, LANE), tn)
    n_n = n_emb_p // tn

    vmem_bytes = _vmem_capacity_bytes()
    b_p_budget = _round_up(bt, SUB)              # upper bound on b_p (b <= bt)
    tk = _pick_tk(d_in, bt, tn, n_cls_p, b_p_budget, vmem_bytes)
    d_in_p = _round_up(d_in, tk)
    vmem_limit = _vmem_limit_bytes(tk, bt, tn, n_cls_p, b_p_budget, vmem_bytes)

    wv_bf = jnp.pad(params["w_vis"],
                    ((0, d_in_p - d_in), (0, n_emb_p - n_emb))
                    ).astype(jnp.bfloat16)
    bv = jnp.pad(params["b_vis"].astype(jnp.float32),
                 ((0, 0), (0, n_emb_p - n_emb)))
    wf = jnp.pad(params["w_fc"].astype(jnp.float32),
                 ((0, n_emb_p - n_emb), (0, n_cls_p - n_cls)))
    bf = jnp.pad(params["b_fc"].astype(jnp.float32),
                 ((0, 0), (0, n_cls_p - n_cls)))

    return {
        "wv_bf": wv_bf, "bv": bv, "wf": wf, "bf": bf,
        "dims": dict(d_in=d_in, d_in_p=d_in_p, n_emb=n_emb, n_emb_p=n_emb_p,
                     n_cls=n_cls, n_cls_p=n_cls_p, tk=tk, tn=tn, n_n=n_n,
                     vmem_limit=vmem_limit),
    }


# ---------------------------------------------------------------------------
# Forward wrapper: activation padding + the single fused pallas_call.
# ---------------------------------------------------------------------------
def video_clip_forward(image, prepped, n_seg):
    """image: (bt, C, H, W) f32 NCHW; prepped: output of prepare_params."""
    dims = prepped["dims"]
    bt = image.shape[0]
    assert bt % n_seg == 0, "image.shape[0] must be a multiple of n_seg"
    b = bt // n_seg

    d_in, d_in_p = dims["d_in"], dims["d_in_p"]
    tk, tn, n_n = dims["tk"], dims["tn"], dims["n_n"]
    n_emb_p, n_cls_p = dims["n_emb_p"], dims["n_cls_p"]
    n_k = d_in_p // tk

    LANE, SUB = 128, 8
    b_p = _round_up(b, SUB)

    x_flat = image.reshape(bt, -1)
    assert x_flat.shape[1] == d_in
    x_bf = jnp.pad(x_flat.astype(jnp.bfloat16),
                   ((0, 0), (0, d_in_p - d_in)))

    # Mean-pooling matrix: row i averages frames [i*n_seg, (i+1)*n_seg).
    rows = jnp.arange(b_p, dtype=jnp.int32)[:, None]
    cols = jnp.arange(bt, dtype=jnp.int32)[None, :]
    pool = jnp.where(cols // n_seg == rows, 1.0 / n_seg, 0.0
                     ).astype(jnp.float32)

    flops = (2 * bt * d_in_p * n_emb_p
             + 2 * b_p * bt * n_emb_p
             + 2 * b_p * n_emb_p * n_cls_p)
    bytes_accessed = (n_n * bt * d_in_p * 2          # x (re-read per N block)
                      + d_in_p * n_emb_p * 2         # W_vis (bf16)
                      + n_emb_p * 4                  # b_vis
                      + n_n * b_p * bt * 4           # pool
                      + n_emb_p * n_cls_p * 4        # W_fc
                      + n_n * n_cls_p * 4            # b_fc
                      + n_n * b_p * n_cls_p * 4)     # partial logits out
    cost = pl.CostEstimate(flops=flops, transcendentals=0,
                           bytes_accessed=bytes_accessed)

    def build_call(single_buffer_invariants):
        kw = ({"pipeline_mode": pl.Buffered(1)}
              if single_buffer_invariants else {})
        in_specs = [
            pl.BlockSpec((bt, tk), lambda n, k: (0, k)),            # x K-tile
            pl.BlockSpec((tk, tn), lambda n, k: (k, n)),            # W_vis
            pl.BlockSpec((1, tn), lambda n, k: (0, n), **kw),       # b_vis
            pl.BlockSpec((b_p, bt), lambda n, k: (0, 0), **kw),     # pool
            pl.BlockSpec((tn, n_cls_p), lambda n, k: (n, 0), **kw),  # W_fc
            pl.BlockSpec((1, n_cls_p), lambda n, k: (0, 0), **kw),  # b_fc
        ]
        return pl.pallas_call(
            _fused_videoclip_kernel,
            out_shape=jax.ShapeDtypeStruct((n_n, b_p, n_cls_p), jnp.float32),
            grid_spec=pltpu.PrefetchScalarGridSpec(
                num_scalar_prefetch=0,
                grid=(n_n, n_k),                 # reduction axis (K) last
                in_specs=in_specs,
                out_specs=pl.BlockSpec((1, b_p, n_cls_p),
                                       lambda n, k: (n, 0, 0)),
                scratch_shapes=[pltpu.VMEM((bt, tn), jnp.float32)],
            ),
            compiler_params=pltpu.CompilerParams(
                dimension_semantics=("parallel", "arbitrary"),
                vmem_limit_bytes=dims["vmem_limit"]),
            cost_estimate=cost,
        )

    args = (x_bf, prepped["wv_bf"], prepped["bv"], pool,
            prepped["wf"], prepped["bf"])
    try:
        parts = build_call(True)(*args)
    except Exception:
        # Fallback: this JAX build does not honor pl.Buffered on the main
        # pallas_call pipeline -> run with default double-buffering.
        parts = build_call(False)(*args)

    logits_p = jnp.sum(parts, axis=0) if n_n > 1 else parts[0]
    # Slice the lane/sublane padding back off.
    return logits_p[:b, :dims["n_cls"]]


def init_params(key, d_in, n_emb, n_cls):
    """Deterministic PyTorch-Linear-style init (uniform +-1/sqrt(fan_in))."""
    k1, k2, k3, k4 = jax.random.split(key, 4)
    lim_v = 1.0 / jnp.sqrt(d_in)
    lim_f = 1.0 / jnp.sqrt(n_emb)
    return {
        "w_vis": jax.random.uniform(k1, (d_in, n_emb), jnp.float32, -lim_v, lim_v),
        "b_vis": jax.random.uniform(k2, (1, n_emb), jnp.float32, -lim_v, lim_v),
        "w_fc": jax.random.uniform(k3, (n_emb, n_cls), jnp.float32, -lim_f, lim_f),
        "b_fc": jax.random.uniform(k4, (1, n_cls), jnp.float32, -lim_f, lim_f),
    }


if __name__ == "__main__":
    # Small shapes consistent with the module's forward:
    #   batch b = 2, n_seg = 8 -> bt = 16 frames
    #   frame = (C=4, H=16, W=16) NCHW, n_emb = 32, num_classes = 10
    b, n_seg = 2, 8
    C, H, W = 4, 16, 16
    n_emb, n_cls = 32, 10
    bt = b * n_seg
    d_in = C * H * W

    key = jax.random.PRNGKey(0)
    k_img, k_par = jax.random.split(key)
    image = jax.random.normal(k_img, (bt, C, H, W), jnp.float32)
    params = init_params(k_par, d_in, n_emb, n_cls)

    prepped = prepare_params(params, bt=bt)     # one-time weight prep (hoisted)
    logit = video_clip_forward(image, prepped, n_seg)
    logit = jax.block_until_ready(logit)
    assert logit.shape == (b, n_cls), logit.shape

    # Pure-JAX reference on the same bf16-cast streaming operands (the kernel
    # streams x / W_vis in bf16 with f32 accumulation).
    xb = image.reshape(bt, -1).astype(jnp.bfloat16).astype(jnp.float32)
    wb = params["w_vis"].astype(jnp.bfloat16).astype(jnp.float32)
    ref_emb = xb @ wb + params["b_vis"]
    ref_fused = ref_emb.reshape(b, n_seg, n_emb).mean(axis=1)
    ref_logit = ref_fused @ params["w_fc"] + params["b_fc"]
    assert jnp.allclose(logit, ref_logit, atol=5e-3, rtol=5e-3), (
        float(jnp.max(jnp.abs(logit - ref_logit))))

    print("KERNEL_OK")
</pallas_src>

<mosaic_0001>
module attributes {stable_mosaic.version = 11 : i64} {
  func.func @_fused_videoclip_kernel(%arg0: i32, %arg1: i32, %arg2: memref<16x1024xbf16, #tpu.memory_space<vmem>>, %arg3: memref<1024x128xbf16, #tpu.memory_space<vmem>>, %arg4: memref<1x128xf32, #tpu.memory_space<vmem>>, %arg5: memref<8x16xf32, #tpu.memory_space<vmem>>, %arg6: memref<128x128xf32, #tpu.memory_space<vmem>>, %arg7: memref<1x128xf32, #tpu.memory_space<vmem>>, %arg8: memref<1x8x128xf32, #tpu.memory_space<vmem>>, %arg9: memref<16x128xf32, #tpu.memory_space<vmem>>) attributes {dimension_semantics = [#tpu.dimension_semantics<parallel>, #tpu.dimension_semantics<arbitrary>], iteration_bounds = array<i64: 1, 1>, scalar_prefetch = 0 : i64, scratch_operands = 1 : i64, tpu.core_type = #tpu.core_type<tc>, window_params = [{transform_indices = @transform_0, window_bounds = array<i64: 16, 1024>}, {transform_indices = @transform_1, window_bounds = array<i64: 1024, 128>}, {pipeline_mode = #tpu.pipeline_mode<synchronous>, transform_indices = @transform_2, window_bounds = array<i64: 1, 128>}, {pipeline_mode = #tpu.pipeline_mode<synchronous>, transform_indices = @transform_3, window_bounds = array<i64: 8, 16>}, {pipeline_mode = #tpu.pipeline_mode<synchronous>, transform_indices = @transform_4, window_bounds = array<i64: 128, 128>}, {pipeline_mode = #tpu.pipeline_mode<synchronous>, transform_indices = @transform_5, window_bounds = array<i64: 1, 128>}, {transform_indices = @transform_6, window_bounds = array<i64: 1, 8, 128>}]} {
    %c0 = arith.constant 0 : index
    %c0_0 = arith.constant 0 : index
    %0 = vector.load %arg2[%c0, %c0_0] : memref<16x1024xbf16, #tpu.memory_space<vmem>>, vector<16x1024xbf16>
    %c0_1 = arith.constant 0 : index
    %c0_2 = arith.constant 0 : index
    %1 = vector.load %arg3[%c0_1, %c0_2] : memref<1024x128xbf16, #tpu.memory_space<vmem>>, vector<1024x128xbf16>
    %cst = arith.constant dense<0.000000e+00> : vector<16x128xf32>
    %2 = tpu.matmul %0, %1, %cst {dimension_numbers = #tpu.dot_dimension_numbers<[1], [0], [0], [1], [0, 0, 1, 1], [], []>} : vector<16x1024xbf16>, vector<1024x128xbf16>, vector<16x128xf32> -> vector<16x128xf32>
    %c0_i32 = arith.constant 0 : i32
    %3 = arith.cmpi eq, %arg1, %c0_i32 : i32
    %4 = arith.extui %3 : i1 to i32
    %c0_i32_3 = arith.constant 0 : i32
    %5 = arith.cmpi ne, %4, %c0_i32_3 : i32
    scf.if %5 {
      %c0_8 = arith.constant 0 : index
      %c0_9 = arith.constant 0 : index
      %12 = vector.load %arg9[%c0_8, %c0_9] : memref<16x128xf32, #tpu.memory_space<vmem>>, vector<16x128xf32>
      tpu.vector_store %arg9[%c0_8, %c0_9], %2 {strides = array<i32>} : memref<16x128xf32, #tpu.memory_space<vmem>>, vector<16x128xf32>,
    } else {
    }
    %c0_i32_4 = arith.constant 0 : i32
    %6 = arith.cmpi sgt, %arg1, %c0_i32_4 : i32
    %7 = arith.extui %6 : i1 to i32
    %c0_i32_5 = arith.constant 0 : i32
    %8 = arith.cmpi ne, %7, %c0_i32_5 : i32
    scf.if %8 {
      %c0_8 = arith.constant 0 : index
      %c0_9 = arith.constant 0 : index
      %12 = vector.load %arg9[%c0_8, %c0_9] : memref<16x128xf32, #tpu.memory_space<vmem>>, vector<16x128xf32>
      %13 = arith.addf %12, %2 : vector<16x128xf32>
      %c0_10 = arith.constant 0 : index
      %c0_11 = arith.constant 0 : index
      %14 = vector.load %arg9[%c0_10, %c0_11] : memref<16x128xf32, #tpu.memory_space<vmem>>, vector<16x128xf32>
      tpu.vector_store %arg9[%c0_10, %c0_11], %13 {strides = array<i32>} : memref<16x128xf32, #tpu.memory_space<vmem>>, vector<16x128xf32>,
    } else {
    }
    %c0_i32_6 = arith.constant 0 : i32
    %9 = arith.cmpi eq, %arg1, %c0_i32_6 : i32
    %10 = arith.extui %9 : i1 to i32
    %c0_i32_7 = arith.constant 0 : i32
    %11 = arith.cmpi ne, %10, %c0_i32_7 : i32
    scf.if %11 {
      %c0_8 = arith.constant 0 : index
      %c0_9 = arith.constant 0 : index
      %12 = vector.load %arg9[%c0_8, %c0_9] : memref<16x128xf32, #tpu.memory_space<vmem>>, vector<16x128xf32>
      %c0_10 = arith.constant 0 : index
      %c0_11 = arith.constant 0 : index
      %13 = vector.load %arg4[%c0_10, %c0_11] : memref<1x128xf32, #tpu.memory_space<vmem>>, vector<1x128xf32>
      %14 = vector.broadcast %13 : vector<1x128xf32> to vector<16x128xf32>
      %15 = arith.addf %12, %14 : vector<16x128xf32>
      %c0_12 = arith.constant 0 : index
      %c0_13 = arith.constant 0 : index
      %16 = vector.load %arg5[%c0_12, %c0_13] : memref<8x16xf32, #tpu.memory_space<vmem>>, vector<8x16xf32>
      %cst_14 = arith.constant dense<0.000000e+00> : vector<8x128xf32>
      %17 = tpu.matmul %16, %15, %cst_14 {dimension_numbers = #tpu.dot_dimension_numbers<[1], [0], [0], [1], [0, 0, 1, 1], [], []>} : vector<8x16xf32>, vector<16x128xf32>, vector<8x128xf32> -> vector<8x128xf32>
      %c0_15 = arith.constant 0 : index
      %c0_16 = arith.constant 0 : index
      %18 = vector.load %arg6[%c0_15, %c0_16] : memref<128x128xf32, #tpu.memory_space<vmem>>, vector<128x128xf32>
      %cst_17 = arith.constant dense<0.000000e+00> : vector<8x128xf32>
      %19 = tpu.matmul %17, %18, %cst_17 {dimension_numbers = #tpu.dot_dimension_numbers<[1], [0], [0], [1], [0, 0, 1, 1], [], []>} : vector<8x128xf32>, vector<128x128xf32>, vector<8x128xf32> -> vector<8x128xf32>
      %c0_i32_18 = arith.constant 0 : i32
      %20 = arith.cmpi eq, %arg0, %c0_i32_18 : i32
      %21 = arith.extui %20 : i1 to i32
      %22 = arith.sitofp %21 : i32 to f32
      %c0_19 = arith.constant 0 : index
      %c0_20 = arith.constant 0 : index
      %23 = vector.load %arg7[%c0_19, %c0_20] : memref<1x128xf32, #tpu.memory_space<vmem>>, vector<1x128xf32>
      %24 = vector.broadcast %22 : f32 to vector<1x128xf32>
      %25 = arith.mulf %24, %23 : vector<1x128xf32>
      %26 = vector.broadcast %25 : vector<1x128xf32> to vector<8x128xf32>
      %27 = arith.addf %19, %26 : vector<8x128xf32>
      %c0_21 = arith.constant 0 : index
      %c0_22 = arith.constant 0 : index
      %c0_23 = arith.constant 0 : index
      %28 = vector.load %arg8[%c0_21, %c0_22, %c0_23] : memref<1x8x128xf32, #tpu.memory_space<vmem>>, vector<1x8x128xf32>
      %29 = vector.shape_cast %28 : vector<1x8x128xf32> to vector<8x128xf32>
      %30 = vector.shape_cast %27 : vector<8x128xf32> to vector<1x8x128xf32>
      tpu.vector_store %arg8[%c0_21, %c0_22, %c0_23], %30 {strides = array<i32>} : memref<1x8x128xf32, #tpu.memory_space<vmem>>, vector<1x8x128xf32>,
    } else {
    }
    return
  }
  func.func @transform_0(%arg0: i32, %arg1: i32) -> (i32, i32) {
    %c0_i32 = arith.constant 0 : i32
    %c0_i32_0 = arith.constant 0 : i32
    return %c0_i32, %arg1 : i32, i32
  }
  func.func @transform_1(%arg0: i32, %arg1: i32) -> (i32, i32) {
    %c0_i32 = arith.constant 0 : i32
    return %arg1, %arg0 : i32, i32
  }
  func.func @transform_2(%arg0: i32, %arg1: i32) -> (i32, i32) {
    %c0_i32 = arith.constant 0 : i32
    %c0_i32_0 = arith.constant 0 : i32
    return %c0_i32, %arg0 : i32, i32
  }
  func.func @transform_3(%arg0: i32, %arg1: i32) -> (i32, i32) {
    %c0_i32 = arith.constant 0 : i32
    %c0_i32_0 = arith.constant 0 : i32
    %c0_i32_1 = arith.constant 0 : i32
    return %c0_i32, %c0_i32_0 : i32, i32
  }
  func.func @transform_4(%arg0: i32, %arg1: i32) -> (i32, i32) {
    %c0_i32 = arith.constant 0 : i32
    %c0_i32_0 = arith.constant 0 : i32
    return %arg0, %c0_i32 : i32, i32
  }
  func.func @transform_5(%arg0: i32, %arg1: i32) -> (i32, i32) {
    %c0_i32 = arith.constant 0 : i32
    %c0_i32_0 = arith.constant 0 : i32
    %c0_i32_1 = arith.constant 0 : i32
    return %c0_i32, %c0_i32_0 : i32, i32
  }
  func.func @transform_6(%arg0: i32, %arg1: i32) -> (i32, i32, i32) {
    %c0_i32 = arith.constant 0 : i32
    %c0_i32_0 = arith.constant 0 : i32
    %c0_i32_1 = arith.constant 0 : i32
    return %arg0, %c0_i32, %c0_i32_0 : i32, i32, i32
  }
}

module attributes {stable_mosaic.version = 11 : i64} {
  func.func @_fused_videoclip_kernel(%arg0: i32, %arg1: i32, %arg2: memref<16x1024xbf16, #tpu.memory_space<vmem>>, %arg3: memref<1024x128xbf16, #tpu.memory_space<vmem>>, %arg4: memref<1x128xf32, #tpu.memory_space<vmem>>, %arg5: memref<8x16xf32, #tpu.memory_space<vmem>>, %arg6: memref<128x128xf32, #tpu.memory_space<vmem>>, %arg7: memref<1x128xf32, #tpu.memory_space<vmem>>, %arg8: memref<1x8x128xf32, #tpu.memory_space<vmem>>, %arg9: memref<16x128xf32, #tpu.memory_space<vmem>>) attributes {dimension_semantics = [#tpu.dimension_semantics<parallel>, #tpu.dimension_semantics<arbitrary>], iteration_bounds = array<i64: 1, 1>, scalar_prefetch = 0 : i64, scratch_operands = 1 : i64, tpu.core_type = #tpu.core_type<tc>, window_params = [{transform_indices = @transform_0, window_bounds = array<i64: 16, 1024>}, {transform_indices = @transform_1, window_bounds = array<i64: 1024, 128>}, {transform_indices = @transform_2, window_bounds = array<i64: 1, 128>}, {pipeline_mode = #tpu.pipeline_mode<synchronous>, transform_indices = @transform_3, window_bounds = array<i64: 8, 16>}, {transform_indices = @transform_4, window_bounds = array<i64: 128, 128>}, {pipeline_mode = #tpu.pipeline_mode<synchronous>, transform_indices = @transform_5, window_bounds = array<i64: 1, 128>}, {transform_indices = @transform_6, window_bounds = array<i64: 1, 8, 128>}]} {
    %c0 = arith.constant 0 : index
    %c0_0 = arith.constant 0 : index
    %0 = vector.load %arg2[%c0, %c0_0] : memref<16x1024xbf16, #tpu.memory_space<vmem>>, vector<16x1024xbf16>
    %c0_1 = arith.constant 0 : index
    %c0_2 = arith.constant 0 : index
    %1 = vector.load %arg3[%c0_1, %c0_2] : memref<1024x128xbf16, #tpu.memory_space<vmem>>, vector<1024x128xbf16>
    %cst = arith.constant dense<0.000000e+00> : vector<16x128xf32>
    %2 = tpu.matmul %0, %1, %cst {dimension_numbers = #tpu.dot_dimension_numbers<[1], [0], [0], [1], [0, 0, 1, 1], [], []>} : vector<16x1024xbf16>, vector<1024x128xbf16>, vector<16x128xf32> -> vector<16x128xf32>
    %c0_i32 = arith.constant 0 : i32
    %3 = arith.cmpi eq, %arg1, %c0_i32 : i32
    %4 = arith.extui %3 : i1 to i32
    %c0_i32_3 = arith.constant 0 : i32
    %5 = arith.cmpi ne, %4, %c0_i32_3 : i32
    scf.if %5 {
      %c0_8 = arith.constant 0 : index
      %c0_9 = arith.constant 0 : index
      %12 = vector.load %arg9[%c0_8, %c0_9] : memref<16x128xf32, #tpu.memory_space<vmem>>, vector<16x128xf32>
      tpu.vector_store %arg9[%c0_8, %c0_9], %2 {strides = array<i32>} : memref<16x128xf32, #tpu.memory_space<vmem>>, vector<16x128xf32>,
    } else {
    }
    %c0_i32_4 = arith.constant 0 : i32
    %6 = arith.cmpi sgt, %arg1, %c0_i32_4 : i32
    %7 = arith.extui %6 : i1 to i32
    %c0_i32_5 = arith.constant 0 : i32
    %8 = arith.cmpi ne, %7, %c0_i32_5 : i32
    scf.if %8 {
      %c0_8 = arith.constant 0 : index
      %c0_9 = arith.constant 0 : index
      %12 = vector.load %arg9[%c0_8, %c0_9] : memref<16x128xf32, #tpu.memory_space<vmem>>, vector<16x128xf32>
      %13 = arith.addf %12, %2 : vector<16x128xf32>
      %c0_10 = arith.constant 0 : index
      %c0_11 = arith.constant 0 : index
      %14 = vector.load %arg9[%c0_10, %c0_11] : memref<16x128xf32, #tpu.memory_space<vmem>>, vector<16x128xf32>
      tpu.vector_store %arg9[%c0_10, %c0_11], %13 {strides = array<i32>} : memref<16x128xf32, #tpu.memory_space<vmem>>, vector<16x128xf32>,
    } else {
    }
    %c0_i32_6 = arith.constant 0 : i32
    %9 = arith.cmpi eq, %arg1, %c0_i32_6 : i32
    %10 = arith.extui %9 : i1 to i32
    %c0_i32_7 = arith.constant 0 : i32
    %11 = arith.cmpi ne, %10, %c0_i32_7 : i32
    scf.if %11 {
      %c0_8 = arith.constant 0 : index
      %c0_9 = arith.constant 0 : index
      %12 = vector.load %arg9[%c0_8, %c0_9] : memref<16x128xf32, #tpu.memory_space<vmem>>, vector<16x128xf32>
      %c0_10 = arith.constant 0 : index
      %c0_11 = arith.constant 0 : index
      %13 = vector.load %arg4[%c0_10, %c0_11] : memref<1x128xf32, #tpu.memory_space<vmem>>, vector<1x128xf32>
      %14 = vector.broadcast %13 : vector<1x128xf32> to vector<16x128xf32>
      %15 = arith.addf %12, %14 : vector<16x128xf32>
      %c0_12 = arith.constant 0 : index
      %c0_13 = arith.constant 0 : index
      %16 = vector.load %arg5[%c0_12, %c0_13] : memref<8x16xf32, #tpu.memory_space<vmem>>, vector<8x16xf32>
      %cst_14 = arith.constant dense<0.000000e+00> : vector<8x128xf32>
      %17 = tpu.matmul %16, %15, %cst_14 {dimension_numbers = #tpu.dot_dimension_numbers<[1], [0], [0], [1], [0, 0, 1, 1], [], []>} : vector<8x16xf32>, vector<16x128xf32>, vector<8x128xf32> -> vector<8x128xf32>
      %c0_15 = arith.constant 0 : index
      %c0_16 = arith.constant 0 : index
      %18 = vector.load %arg6[%c0_15, %c0_16] : memref<128x128xf32, #tpu.memory_space<vmem>>, vector<128x128xf32>
      %cst_17 = arith.constant dense<0.000000e+00> : vector<8x128xf32>
      %19 = tpu.matmul %17, %18, %cst_17 {dimension_numbers = #tpu.dot_dimension_numbers<[1], [0], [0], [1], [0, 0, 1, 1], [], []>} : vector<8x128xf32>, vector<128x128xf32>, vector<8x128xf32> -> vector<8x128xf32>
      %c0_i32_18 = arith.constant 0 : i32
      %20 = arith.cmpi eq, %arg0, %c0_i32_18 : i32
      %21 = arith.extui %20 : i1 to i32
      %22 = arith.sitofp %21 : i32 to f32
      %c0_19 = arith.constant 0 : index
      %c0_20 = arith.constant 0 : index
      %23 = vector.load %arg7[%c0_19, %c0_20] : memref<1x128xf32, #tpu.memory_space<vmem>>, vector<1x128xf32>
      %24 = vector.broadcast %22 : f32 to vector<1x128xf32>
      %25 = arith.mulf %24, %23 : vector<1x128xf32>
      %26 = vector.broadcast %25 : vector<1x128xf32> to vector<8x128xf32>
      %27 = arith.addf %19, %26 : vector<8x128xf32>
      %c0_21 = arith.constant 0 : index
      %c0_22 = arith.constant 0 : index
      %c0_23 = arith.constant 0 : index
      %28 = vector.load %arg8[%c0_21, %c0_22, %c0_23] : memref<1x8x128xf32, #tpu.memory_space<vmem>>, vector<1x8x128xf32>
      %29 = vector.shape_cast %28 : vector<1x8x128xf32> to vector<8x128xf32>
      %30 = vector.shape_cast %27 : vector<8x128xf32> to vector<1x8x128xf32>
      tpu.vector_store %arg8[%c0_21, %c0_22, %c0_23], %30 {strides = array<i32>} : memref<1x8x128xf32, #tpu.memory_space<vmem>>, vector<1x8x128xf32>,
    } else {
    }
    return
  }
  func.func @transform_0(%arg0: i32, %arg1: i32) -> (i32, i32) {
    %c0_i32 = arith.constant 0 : i32
    %c0_i32_0 = arith.constant 0 : i32
    return %c0_i32, %arg1 : i32, i32
  }
  func.func @transform_1(%arg0: i32, %arg1: i32) -> (i32, i32) {
    %c0_i32 = arith.constant 0 : i32
    return %arg1, %arg0 : i32, i32
  }
  func.func @transform_2(%arg0: i32, %arg1: i32) -> (i32, i32) {
    %c0_i32 = arith.constant 0 : i32
    %c0_i32_0 = arith.constant 0 : i32
    return %c0_i32, %arg0 : i32, i32
  }
  func.func @transform_3(%arg0: i32, %arg1: i32) -> (i32, i32) {
    %c0_i32 = arith.constant 0 : i32
    %c0_i32_0 = arith.constant 0 : i32
    %c0_i32_1 = arith.constant 0 : i32
    return %c0_i32, %c0_i32_0 : i32, i32
  }
  func.func @transform_4(%arg0: i32, %arg1: i32) -> (i32, i32) {
    %c0_i32 = arith.constant 0 : i32
    %c0_i32_0 = arith.constant 0 : i32
    return %arg0, %c0_i32 : i32, i32
  }
  func.func @transform_5(%arg0: i32, %arg1: i32) -> (i32, i32) {
    %c0_i32 = arith.constant 0 : i32
    %c0_i32_0 = arith.constant 0 : i32
    %c0_i32_1 = arith.constant 0 : i32
    return %c0_i32, %c0_i32_0 : i32, i32
  }
  func.func @transform_6(%arg0: i32, %arg1: i32) -> (i32, i32, i32) {
    %c0_i32 = arith.constant 0 : i32
    %c0_i32_0 = arith.constant 0 : i32
    %c0_i32_1 = arith.constant 0 : i32
    return %arg0, %c0_i32, %c0_i32_0 : i32, i32, i32
  }
}

</mosaic_0001>

<llo_original>
// kernel: tpu_custom_call.1
$region0: #{tpu_custom_call.1}
  #allocation0 [shape = 'u32[]', space=smem, size = 0x4, offset = 0x4, fixed_abs, tag = 'smem constant byte address 0x4 - core index']
  #allocation1 [shape = 'u32[144,128]{1,0:T(1,128)}', space=vmem, size = 0x12000, scoped, tag = 'internal scratch']
  #allocation2 [shape = 'f32[16,128]{1,0:T(8,128)}', space=vmem, size = 0x2000, scoped, tag = 'scratch operand']
  %s0 = inlined_call_operand.hbm [shape: bf16[16,1024], index: 0, kind: input, shape index: {}]
  %s1 = inlined_call_operand.hbm [shape: bf16[1024,128], index: 1, kind: input, shape index: {}]
  %s2 = inlined_call_operand.vmem [shape: f32[1,128], index: 2, kind: input, shape index: {}]
  %s3 = inlined_call_operand.vmem [shape: f32[8,16], index: 3, kind: input, shape index: {}]
  %s4 = inlined_call_operand.hbm [shape: f32[128,128], index: 4, kind: input, shape index: {}]
  %s5 = inlined_call_operand.vmem [shape: f32[1,128], index: 5, kind: input, shape index: {}]
  %s6 = inlined_call_operand.hbm [shape: f32[1,8,128], index: 6, kind: output, shape index: {}]
  %s7 = sld [smem:[#allocation0]]
  $region58: #{tpu_custom_call.1} parent=0
    _
  %s9 = ssub.s32 1, %s7
  %s10 = scalar_select 0, %s9, %s7
  $region1: #{tpu_custom_call.1} parent=0
    #allocation3 [shape = 'u8[32768]{0}', space=vmem, size = 0x8000, scoped, tag = 'input window, operand 0, single buffered']
    #allocation4 [shape = 's32[1]{0}', space=sflag, size = 0x4, scoped, tag = 'scoped memory for tpu_custom_call.1']
    #allocation5 [shape = 's32[1]{0}', space=sflag, size = 0x4, scoped, tag = 'scoped memory for tpu_custom_call.1']
    #allocation6 [shape = 'u8[262144]{0}', space=vmem, size = 0x40000, scoped, tag = 'input window, operand 1, single buffered']
    #allocation7 [shape = 's32[1]{0}', space=sflag, size = 0x4, scoped, tag = 'scoped memory for tpu_custom_call.1']
    #allocation8 [shape = 'u8[65536]{0}', space=vmem, size = 0x10000, scoped, tag = 'input window, operand 4, single buffered']
    #allocation9 [shape = 'u8[4096]{0}', space=vmem, size = 0x1000, scoped, tag = 'output window, operand 0, single buffered']
    %11 = vsyncpa [#allocation4], 0
    %12 = vsyncpa [#allocation7], 0
    %13 = vsyncpa [#allocation5], 0
    // Predicated region
    $region2: #{tpu_custom_call.1} parent=1 // pred_check
      _
    $region3: #{tpu_custom_call.1} parent=1 // pred_check_branch
      %15 = sbr.rel (0) target = $region5
    $region4: #{tpu_custom_call.1} parent=1 // pred_region
      %s17 = ssub.s32 1024, 1024
      %18 = vsyncadd [#allocation4], %s17
      %s19 = sshll.u32 [#allocation3], 4
      %s20 = int_to_ptr.vmem [resolvable:$true] %s19
      %25 = dma.hbm_to_vmem [thread:$0]  %s0, 1024, %s20, [#allocation4], 512, 512, 32
    $region5: #{tpu_custom_call.1} parent=1 // pred_fallthru
      _
    // Predicated region
    $region6: #{tpu_custom_call.1} parent=1 // pred_check
      _
    $region7: #{tpu_custom_call.1} parent=1 // pred_check_branch
      %27 = sbr.rel (0) target = $region9
    $region8: #{tpu_custom_call.1} parent=1 // pred_region
      %s29 = ssub.s32 8192, 8192
      %30 = vsyncadd [#allocation7], %s29
      %s31 = sshll.u32 [#allocation6], 4
      %s32 = int_to_ptr.vmem [resolvable:$true] %s31
      %37 = dma.hbm_to_vmem [thread:$0]  %s1, 8192, %s32, [#allocation7], 64, 64, 4
    $region9: #{tpu_custom_call.1} parent=1 // pred_fallthru
      _
    // Predicated region
    $region10: #{tpu_custom_call.1} parent=1 // pred_check
      _
    $region11: #{tpu_custom_call.1} parent=1 // pred_check_branch
      %39 = sbr.rel (0) target = $region13
    $region12: #{tpu_custom_call.1} parent=1 // pred_region
      _
    $region13: #{tpu_custom_call.1} parent=1 // pred_fallthru
      _
    // Predicated region
    $region14: #{tpu_custom_call.1} parent=1 // pred_check
      _
    $region15: #{tpu_custom_call.1} parent=1 // pred_check_branch
      %41 = sbr.rel (0) target = $region17
    $region16: #{tpu_custom_call.1} parent=1 // pred_region
      _
    $region17: #{tpu_custom_call.1} parent=1 // pred_fallthru
      _
    // Predicated region
    $region18: #{tpu_custom_call.1} parent=1 // pred_check
      _
    $region19: #{tpu_custom_call.1} parent=1 // pred_check_branch
      %43 = sbr.rel (0) target = $region21
    $region20: #{tpu_custom_call.1} parent=1 // pred_region
      %s45 = ssub.s32 2048, 2048
      %46 = vsyncadd [#allocation7], %s45
      %s47 = sshll.u32 [#allocation8], 4
      %s48 = int_to_ptr.vmem [resolvable:$true] %s47
      %53 = dma.hbm_to_vmem [thread:$0]  %s4, 2048, %s48, [#allocation7], 128, 128, 8
    $region21: #{tpu_custom_call.1} parent=1 // pred_fallthru
      _
    // Predicated region
    $region22: #{tpu_custom_call.1} parent=1 // pred_check
      _
    $region23: #{tpu_custom_call.1} parent=1 // pred_check_branch
      %55 = sbr.rel (0) target = $region25
    $region24: #{tpu_custom_call.1} parent=1 // pred_region
      _
    $region25: #{tpu_custom_call.1} parent=1 // pred_fallthru
      _
    // Predicated region
    $region26: #{tpu_custom_call.1} parent=1 // pred_check
      _
    $region27: #{tpu_custom_call.1} parent=1 // pred_check_branch
      %57 = sbr.rel (0) target = $region29
    $region28: #{tpu_custom_call.1} parent=1 // pred_region
      %58 = dma.done [#allocation4], 1024
    $region29: #{tpu_custom_call.1} parent=1 // pred_fallthru
      _
    // Predicated region
    $region30: #{tpu_custom_call.1} parent=1 // pred_check
      _
    $region31: #{tpu_custom_call.1} parent=1 // pred_check_branch
      %60 = sbr.rel (0) target = $region33
    $region32: #{tpu_custom_call.1} parent=1 // pred_region
      %61 = dma.done [#allocation7], 8192
    $region33: #{tpu_custom_call.1} parent=1 // pred_fallthru
      _
    // Predicated region
    $region34: #{tpu_custom_call.1} parent=1 // pred_check
      _
    $region35: #{tpu_custom_call.1} parent=1 // pred_check_branch
      %63 = sbr.rel (0) target = $region37
    $region36: #{tpu_custom_call.1} parent=1 // pred_region
      %64 = dma.done [#allocation7], 2048
    $region37: #{tpu_custom_call.1} parent=1 // pred_fallthru
      _
    %v66 = vld [vmem:[#allocation3] sm:$0xff]
    %v67 = vld [vmem:[#allocation3 + $0x8] sm:$0xff]
    %v68 = vld [vmem:[#allocation3 + $0x10] sm:$0xff]
    %v69 = vld [vmem:[#allocation3 + $0x18] sm:$0xff]
    %v70 = vld [vmem:[#allocation3 + $0x20] sm:$0xff]
    %v71 = vld [vmem:[#allocation3 + $0x28] sm:$0xff]
    %v72 = vld [vmem:[#allocation3 + $0x30] sm:$0xff]
    %v73 = vld [vmem:[#allocation3 + $0x38] sm:$0xff]
    %v74 = vld [vmem:[#allocation6] sm:$0xf]
    %v75 = vld [vmem:[#allocation6 + $0x4] sm:$0xf]
    %v76 = vld [vmem:[#allocation6 + $0x8] sm:$0xf]
    %v77 = vld [vmem:[#allocation6 + $0xc] sm:$0xf]
    %v78 = vld [vmem:[#allocation6 + $0x10] sm:$0xf]
    %v79 = vld [vmem:[#allocation6 + $0x14] sm:$0xf]
    %v80 = vld [vmem:[#allocation6 + $0x18] sm:$0xf]
    %v81 = vld [vmem:[#allocation6 + $0x1c] sm:$0xf]
    %v82 = vld [vmem:[#allocation6 + $0x20] sm:$0xf]
    %v83 = vld [vmem:[#allocation6 + $0x24] sm:$0xf]
    %v84 = vld [vmem:[#allocation6 + $0x28] sm:$0xf]
    %v85 = vld [vmem:[#allocation6 + $0x2c] sm:$0xf]
    %v86 = vld [vmem:[#allocation6 + $0x30] sm:$0xf]
    %v87 = vld [vmem:[#allocation6 + $0x34] sm:$0xf]
    %v88 = vld [vmem:[#allocation6 + $0x38] sm:$0xf]
    %v89 = vld [vmem:[#allocation6 + $0x3c] sm:$0xf]
    %v90 = vld [vmem:[#allocation6 + $0x40] sm:$0xf]
    %v91 = vld [vmem:[#allocation6 + $0x44] sm:$0xf]
    %v92 = vld [vmem:[#allocation6 + $0x48] sm:$0xf]
    %v93 = vld [vmem:[#allocation6 + $0x4c] sm:$0xf]
    %v94 = vld [vmem:[#allocation6 + $0x50] sm:$0xf]
    %v95 = vld [vmem:[#allocation6 + $0x54] sm:$0xf]
    %v96 = vld [vmem:[#allocation6 + $0x58] sm:$0xf]
    %v97 = vld [vmem:[#allocation6 + $0x5c] sm:$0xf]
    %v98 = vld [vmem:[#allocation6 + $0x60] sm:$0xf]
    %v99 = vld [vmem:[#allocation6 + $0x64] sm:$0xf]
    %v100 = vld [vmem:[#allocation6 + $0x68] sm:$0xf]
    %v101 = vld [vmem:[#allocation6 + $0x6c] sm:$0xf]
    %v102 = vld [vmem:[#allocation6 + $0x70] sm:$0xf]
    %v103 = vld [vmem:[#allocation6 + $0x74] sm:$0xf]
    %v104 = vld [vmem:[#allocation6 + $0x78] sm:$0xf]
    %v105 = vld [vmem:[#allocation6 + $0x7c] sm:$0xf]
    %v106 = vld [vmem:[#allocation6 + $0x80] sm:$0xf]
    %v107 = vld [vmem:[#allocation6 + $0x84] sm:$0xf]
    %v108 = vld [vmem:[#allocation6 + $0x88] sm:$0xf]
    %v109 = vld [vmem:[#allocation6 + $0x8c] sm:$0xf]
    %v110 = vld [vmem:[#allocation6 + $0x90] sm:$0xf]
    %v111 = vld [vmem:[#allocation6 + $0x94] sm:$0xf]
    %v112 = vld [vmem:[#allocation6 + $0x98] sm:$0xf]
    %v113 = vld [vmem:[#allocation6 + $0x9c] sm:$0xf]
    %v114 = vld [vmem:[#allocation6 + $0xa0] sm:$0xf]
    %v115 = vld [vmem:[#allocation6 + $0xa4] sm:$0xf]
    %v116 = vld [vmem:[#allocation6 + $0xa8] sm:$0xf]
    %v117 = vld [vmem:[#allocation6 + $0xac] sm:$0xf]
    %v118 = vld [vmem:[#allocation6 + $0xb0] sm:$0xf]
    %v119 = vld [vmem:[#allocation6 + $0xb4] sm:$0xf]
    %v120 = vld [vmem:[#allocation6 + $0xb8] sm:$0xf]
    %v121 = vld [vmem:[#allocation6 + $0xbc] sm:$0xf]
    %v122 = vld [vmem:[#allocation6 + $0xc0] sm:$0xf]
    %v123 = vld [vmem:[#allocation6 + $0xc4] sm:$0xf]
    %v124 = vld [vmem:[#allocation6 + $0xc8] sm:$0xf]
    %v125 = vld [vmem:[#allocation6 + $0xcc] sm:$0xf]
    %v126 = vld [vmem:[#allocation6 + $0xd0] sm:$0xf]
    %v127 = vld [vmem:[#allocation6 + $0xd4] sm:$0xf]
    %v128 = vld [vmem:[#allocation6 + $0xd8] sm:$0xf]
    %v129 = vld [vmem:[#allocation6 + $0xdc] sm:$0xf]
    %v130 = vld [vmem:[#allocation6 + $0xe0] sm:$0xf]
    %v131 = vld [vmem:[#allocation6 + $0xe4] sm:$0xf]
    %v132 = vld [vmem:[#allocation6 + $0xe8] sm:$0xf]
    %v133 = vld [vmem:[#allocation6 + $0xec] sm:$0xf]
    %v134 = vld [vmem:[#allocation6 + $0xf0] sm:$0xf]
    %v135 = vld [vmem:[#allocation6 + $0xf4] sm:$0xf]
    %v136 = vld [vmem:[#allocation6 + $0xf8] sm:$0xf]
    %v137 = vld [vmem:[#allocation6 + $0xfc] sm:$0xf]
    %v138 = vld [vmem:[#allocation6 + $0x100] sm:$0xf]
    %v139 = vld [vmem:[#allocation6 + $0x104] sm:$0xf]
    %v140 = vld [vmem:[#allocation6 + $0x108] sm:$0xf]
    %v141 = vld [vmem:[#allocation6 + $0x10c] sm:$0xf]
    %v142 = vld [vmem:[#allocation6 + $0x110] sm:$0xf]
    %v143 = vld [vmem:[#allocation6 + $0x114] sm:$0xf]
    %v144 = vld [vmem:[#allocation6 + $0x118] sm:$0xf]
    %v145 = vld [vmem:[#allocation6 + $0x11c] sm:$0xf]
    %v146 = vld [vmem:[#allocation6 + $0x120] sm:$0xf]
    %v147 = vld [vmem:[#allocation6 + $0x124] sm:$0xf]
    %v148 = vld [vmem:[#allocation6 + $0x128] sm:$0xf]
    %v149 = vld [vmem:[#allocation6 + $0x12c] sm:$0xf]
    %v150 = vld [vmem:[#allocation6 + $0x130] sm:$0xf]
    %v151 = vld [vmem:[#allocation6 + $0x134] sm:$0xf]
    %v152 = vld [vmem:[#allocation6 + $0x138] sm:$0xf]
    %v153 = vld [vmem:[#allocation6 + $0x13c] sm:$0xf]
    %v154 = vld [vmem:[#allocation6 + $0x140] sm:$0xf]
    %v155 = vld [vmem:[#allocation6 + $0x144] sm:$0xf]
    %v156 = vld [vmem:[#allocation6 + $0x148] sm:$0xf]
    %v157 = vld [vmem:[#allocation6 + $0x14c] sm:$0xf]
    %v158 = vld [vmem:[#allocation6 + $0x150] sm:$0xf]
    %v159 = vld [vmem:[#allocation6 + $0x154] sm:$0xf]
    %v160 = vld [vmem:[#allocation6 + $0x158] sm:$0xf]
    %v161 = vld [vmem:[#allocation6 + $0x15c] sm:$0xf]
    %v162 = vld [vmem:[#allocation6 + $0x160] sm:$0xf]
    %v163 = vld [vmem:[#allocation6 + $0x164] sm:$0xf]
    %v164 = vld [vmem:[#allocation6 + $0x168] sm:$0xf]
    %v165 = vld [vmem:[#allocation6 + $0x16c] sm:$0xf]
    %v166 = vld [vmem:[#allocation6 + $0x170] sm:$0xf]
    %v167 = vld [vmem:[#allocation6 + $0x174] sm:$0xf]
    %v168 = vld [vmem:[#allocation6 + $0x178] sm:$0xf]
    %v169 = vld [vmem:[#allocation6 + $0x17c] sm:$0xf]
    %v170 = vld [vmem:[#allocation6 + $0x180] sm:$0xf]
    %v171 = vld [vmem:[#allocation6 + $0x184] sm:$0xf]
    %v172 = vld [vmem:[#allocation6 + $0x188] sm:$0xf]
    %v173 = vld [vmem:[#allocation6 + $0x18c] sm:$0xf]
    %v174 = vld [vmem:[#allocation6 + $0x190] sm:$0xf]
    %v175 = vld [vmem:[#allocation6 + $0x194] sm:$0xf]
    %v176 = vld [vmem:[#allocation6 + $0x198] sm:$0xf]
    %v177 = vld [vmem:[#allocation6 + $0x19c] sm:$0xf]
    %v178 = vld [vmem:[#allocation6 + $0x1a0] sm:$0xf]
    %v179 = vld [vmem:[#allocation6 + $0x1a4] sm:$0xf]
    %v180 = vld [vmem:[#allocation6 + $0x1a8] sm:$0xf]
    %v181 = vld [vmem:[#allocation6 + $0x1ac] sm:$0xf]
    %v182 = vld [vmem:[#allocation6 + $0x1b0] sm:$0xf]
    %v183 = vld [vmem:[#allocation6 + $0x1b4] sm:$0xf]
    %v184 = vld [vmem:[#allocation6 + $0x1b8] sm:$0xf]
    %v185 = vld [vmem:[#allocation6 + $0x1bc] sm:$0xf]
    %v186 = vld [vmem:[#allocation6 + $0x1c0] sm:$0xf]
    %v187 = vld [vmem:[#allocation6 + $0x1c4] sm:$0xf]
    %v188 = vld [vmem:[#allocation6 + $0x1c8] sm:$0xf]
    %v189 = vld [vmem:[#allocation6 + $0x1cc] sm:$0xf]
    %v190 = vld [vmem:[#allocation6 + $0x1d0] sm:$0xf]
    %v191 = vld [vmem:[#allocation6 + $0x1d4] sm:$0xf]
    %v192 = vld [vmem:[#allocation6 + $0x1d8] sm:$0xf]
    %v193 = vld [vmem:[#allocation6 + $0x1dc] sm:$0xf]
    %v194 = vld [vmem:[#allocation6 + $0x1e0] sm:$0xf]
    %v195 = vld [vmem:[#allocation6 + $0x1e4] sm:$0xf]
    %v196 = vld [vmem:[#allocation6 + $0x1e8] sm:$0xf]
    %v197 = vld [vmem:[#allocation6 + $0x1ec] sm:$0xf]
    %v198 = vld [vmem:[#allocation6 + $0x1f0] sm:$0xf]
    %v199 = vld [vmem:[#allocation6 + $0x1f4] sm:$0xf]
    %v200 = vld [vmem:[#allocation6 + $0x1f8] sm:$0xf]
    %v201 = vld [vmem:[#allocation6 + $0x1fc] sm:$0xf]
    %v210 = vunpack.c.l.b16 %v66
    %v211 = vunpack.c.h.b16 %v66
    %v212 = vunpack.c.l.b16 %v67
    %v213 = vunpack.c.h.b16 %v67
    %v214 = vunpack.c.l.b16 %v68
    %v215 = vunpack.c.h.b16 %v68
    %v216 = vunpack.c.l.b16 %v69
    %v217 = vunpack.c.h.b16 %v69
    %v218 = vunpack.c.l.b16 %v70
    %v219 = vunpack.c.h.b16 %v70
    %v220 = vunpack.c.l.b16 %v71
    %v221 = vunpack.c.h.b16 %v71
    %v222 = vunpack.c.l.b16 %v72
    %v223 = vunpack.c.h.b16 %v72
    %v224 = vunpack.c.l.b16 %v73
    %v225 = vunpack.c.h.b16 %v73
    %v226 = vpack.c.b16 %v218, %v210
    %v227 = vpack.c.b16 %v219, %v211
    %v228 = vpack.c.b16 %v220, %v212
    %v229 = vpack.c.b16 %v221, %v213
    %v230 = vpack.c.b16 %v222, %v214
    %v231 = vpack.c.b16 %v223, %v215
    %v232 = vpack.c.b16 %v224, %v216
    %v233 = vpack.c.b16 %v225, %v217
    %v370 = vunpack.c.l.b16 %v74
    %v371 = vunpack.c.l.b16 %v75
    %v372 = vunpack.c.l.b16 %v76
    %v373 = vunpack.c.l.b16 %v77
    %v374 = vunpack.c.l.b16 %v78
    %v375 = vunpack.c.l.b16 %v79
    %v376 = vunpack.c.l.b16 %v80
    %v377 = vunpack.c.l.b16 %v81
    %v378 = vunpack.c.l.b16 %v82
    %v379 = vunpack.c.l.b16 %v83
    %v380 = vunpack.c.l.b16 %v84
    %v381 = vunpack.c.l.b16 %v85
    %v382 = vunpack.c.l.b16 %v86
    %v383 = vunpack.c.l.b16 %v87
    %v384 = vunpack.c.l.b16 %v88
    %v385 = vunpack.c.l.b16 %v89
    %v386 = vunpack.c.l.b16 %v90
    %v387 = vunpack.c.l.b16 %v91
    %v388 = vunpack.c.l.b16 %v92
    %v389 = vunpack.c.l.b16 %v93
    %v390 = vunpack.c.l.b16 %v94
    %v391 = vunpack.c.l.b16 %v95
    %v392 = vunpack.c.l.b16 %v96
    %v393 = vunpack.c.l.b16 %v97
    %v394 = vunpack.c.l.b16 %v98
    %v395 = vunpack.c.l.b16 %v99
    %v396 = vunpack.c.l.b16 %v100
    %v397 = vunpack.c.l.b16 %v101
    %v398 = vunpack.c.l.b16 %v102
    %v399 = vunpack.c.l.b16 %v103
    %v400 = vunpack.c.l.b16 %v104
    %v401 = vunpack.c.l.b16 %v105
    %v402 = vunpack.c.l.b16 %v106
    %v403 = vunpack.c.l.b16 %v107
    %v404 = vunpack.c.l.b16 %v108
    %v405 = vunpack.c.l.b16 %v109
    %v406 = vunpack.c.l.b16 %v110
    %v407 = vunpack.c.l.b16 %v111
    %v408 = vunpack.c.l.b16 %v112
    %v409 = vunpack.c.l.b16 %v113
    %v410 = vunpack.c.l.b16 %v114
    %v411 = vunpack.c.l.b16 %v115
    %v412 = vunpack.c.l.b16 %v116
    %v413 = vunpack.c.l.b16 %v117
    %v414 = vunpack.c.l.b16 %v118
    %v415 = vunpack.c.l.b16 %v119
    %v416 = vunpack.c.l.b16 %v120
    %v417 = vunpack.c.l.b16 %v121
    %v418 = vunpack.c.l.b16 %v122
    %v419 = vunpack.c.l.b16 %v123
    %v420 = vunpack.c.l.b16 %v124
    %v421 = vunpack.c.l.b16 %v125
    %v422 = vunpack.c.l.b16 %v126
    %v423 = vunpack.c.l.b16 %v127
    %v424 = vunpack.c.l.b16 %v128
    %v425 = vunpack.c.l.b16 %v129
    %v426 = vunpack.c.l.b16 %v130
    %v427 = vunpack.c.l.b16 %v131
    %v428 = vunpack.c.l.b16 %v132
    %v429 = vunpack.c.l.b16 %v133
    %v430 = vunpack.c.l.b16 %v134
    %v431 = vunpack.c.l.b16 %v135
    %v432 = vunpack.c.l.b16 %v136
    %v433 = vunpack.c.l.b16 %v137
    %v434 = vunpack.c.l.b16 %v138
    %v435 = vunpack.c.l.b16 %v139
    %v436 = vunpack.c.l.b16 %v140
    %v437 = vunpack.c.l.b16 %v141
    %v438 = vunpack.c.l.b16 %v142
    %v439 = vunpack.c.l.b16 %v143
    %v440 = vunpack.c.l.b16 %v144
    %v441 = vunpack.c.l.b16 %v145
    %v442 = vunpack.c.l.b16 %v146
    %v443 = vunpack.c.l.b16 %v147
    %v444 = vunpack.c.l.b16 %v148
    %v445 = vunpack.c.l.b16 %v149
    %v446 = vunpack.c.l.b16 %v150
    %v447 = vunpack.c.l.b16 %v151
    %v448 = vunpack.c.l.b16 %v152
    %v449 = vunpack.c.l.b16 %v153
    %v450 = vunpack.c.l.b16 %v154
    %v451 = vunpack.c.l.b16 %v155
    %v452 = vunpack.c.l.b16 %v156
    %v453 = vunpack.c.l.b16 %v157
    %v454 = vunpack.c.l.b16 %v158
    %v455 = vunpack.c.l.b16 %v159
    %v456 = vunpack.c.l.b16 %v160
    %v457 = vunpack.c.l.b16 %v161
    %v458 = vunpack.c.l.b16 %v162
    %v459 = vunpack.c.l.b16 %v163
    %v460 = vunpack.c.l.b16 %v164
    %v461 = vunpack.c.l.b16 %v165
    %v462 = vunpack.c.l.b16 %v166
    %v463 = vunpack.c.l.b16 %v167
    %v464 = vunpack.c.l.b16 %v168
    %v465 = vunpack.c.l.b16 %v169
    %v466 = vunpack.c.l.b16 %v170
    %v467 = vunpack.c.l.b16 %v171
    %v468 = vunpack.c.l.b16 %v172
    %v469 = vunpack.c.l.b16 %v173
    %v470 = vunpack.c.l.b16 %v174
    %v471 = vunpack.c.l.b16 %v175
    %v472 = vunpack.c.l.b16 %v176
    %v473 = vunpack.c.l.b16 %v177
    %v474 = vunpack.c.l.b16 %v178
    %v475 = vunpack.c.l.b16 %v179
    %v476 = vunpack.c.l.b16 %v180
    %v477 = vunpack.c.l.b16 %v181
    %v478 = vunpack.c.l.b16 %v182
    %v479 = vunpack.c.l.b16 %v183
    %v480 = vunpack.c.l.b16 %v184
    %v481 = vunpack.c.l.b16 %v185
    %v482 = vunpack.c.l.b16 %v186
    %v483 = vunpack.c.l.b16 %v187
    %v484 = vunpack.c.l.b16 %v188
    %v485 = vunpack.c.l.b16 %v189
    %v486 = vunpack.c.l.b16 %v190
    %v487 = vunpack.c.l.b16 %v191
    %v488 = vunpack.c.l.b16 %v192
    %v489 = vunpack.c.l.b16 %v193
    %v490 = vunpack.c.l.b16 %v194
    %v491 = vunpack.c.l.b16 %v195
    %v492 = vunpack.c.l.b16 %v196
    %v493 = vunpack.c.l.b16 %v197
    %v494 = vunpack.c.l.b16 %v198
    %v495 = vunpack.c.l.b16 %v199
    %v496 = vunpack.c.l.b16 %v200
    %v497 = vunpack.c.l.b16 %v201
    %v498 = vpack.c.b16 %v371, %v370
    %v499 = vpack.c.b16 %v373, %v372
    %v500 = vpack.c.b16 %v375, %v374
    %v501 = vpack.c.b16 %v377, %v376
    %v502 = vpack.c.b16 %v379, %v378
    %v503 = vpack.c.b16 %v381, %v380
    %v504 = vpack.c.b16 %v383, %v382
    %v505 = vpack.c.b16 %v385, %v384
    %v506 = vpack.c.b16 %v387, %v386
    %v507 = vpack.c.b16 %v389, %v388
    %v508 = vpack.c.b16 %v391, %v390
    %v509 = vpack.c.b16 %v393, %v392
    %v510 = vpack.c.b16 %v395, %v394
    %v511 = vpack.c.b16 %v397, %v396
    %v512 = vpack.c.b16 %v399, %v398
    %v513 = vpack.c.b16 %v401, %v400
    %v514 = vpack.c.b16 %v403, %v402
    %v515 = vpack.c.b16 %v405, %v404
    %v516 = vpack.c.b16 %v407, %v406
    %v517 = vpack.c.b16 %v409, %v408
    %v518 = vpack.c.b16 %v411, %v410
    %v519 = vpack.c.b16 %v413, %v412
    %v520 = vpack.c.b16 %v415, %v414
    %v521 = vpack.c.b16 %v417, %v416
    %v522 = vpack.c.b16 %v419, %v418
    %v523 = vpack.c.b16 %v421, %v420
    %v524 = vpack.c.b16 %v423, %v422
    %v525 = vpack.c.b16 %v425, %v424
    %v526 = vpack.c.b16 %v427, %v426
    %v527 = vpack.c.b16 %v429, %v428
    %v528 = vpack.c.b16 %v431, %v430
    %v529 = vpack.c.b16 %v433, %v432
    %v530 = vpack.c.b16 %v435, %v434
    %v531 = vpack.c.b16 %v437, %v436
    %v532 = vpack.c.b16 %v439, %v438
    %v533 = vpack.c.b16 %v441, %v440
    %v534 = vpack.c.b16 %v443, %v442
    %v535 = vpack.c.b16 %v445, %v444
    %v536 = vpack.c.b16 %v447, %v446
    %v537 = vpack.c.b16 %v449, %v448
    %v538 = vpack.c.b16 %v451, %v450
    %v539 = vpack.c.b16 %v453, %v452
    %v540 = vpack.c.b16 %v455, %v454
    %v541 = vpack.c.b16 %v457, %v456
    %v542 = vpack.c.b16 %v459, %v458
    %v543 = vpack.c.b16 %v461, %v460
    %v544 = vpack.c.b16 %v463, %v462
    %v545 = vpack.c.b16 %v465, %v464
    %v546 = vpack.c.b16 %v467, %v466
    %v547 = vpack.c.b16 %v469, %v468
    %v548 = vpack.c.b16 %v471, %v470
    %v549 = vpack.c.b16 %v473, %v472
    %v550 = vpack.c.b16 %v475, %v474
    %v551 = vpack.c.b16 %v477, %v476
    %v552 = vpack.c.b16 %v479, %v478
    %v553 = vpack.c.b16 %v481, %v480
    %v554 = vpack.c.b16 %v483, %v482
    %v555 = vpack.c.b16 %v485, %v484
    %v556 = vpack.c.b16 %v487, %v486
    %v557 = vpack.c.b16 %v489, %v488
    %v558 = vpack.c.b16 %v491, %v490
    %v559 = vpack.c.b16 %v493, %v492
    %v560 = vpack.c.b16 %v495, %v494
    %v561 = vpack.c.b16 %v497, %v496
    %626 = vmatprep.subr.bf16.mxu0 0
    %627 = vmatpush1.bf16.msra.mxu0 %v498
    %628 = vmatprep.subr.bf16.mxu0 0
    %629 = vmatpush1.bf16.msra.mxu0 %v499
    %630 = vmatprep.subr.bf16.mxu0 0
    %631 = vmatpush1.bf16.msra.mxu0 %v500
    %632 = vmatprep.subr.bf16.mxu0 0
    %633 = vmatpush1.bf16.msra.mxu0 %v501
    %634 = vmatprep.subr.bf16.mxu0 0
    %635 = vmatpush1.bf16.msra.mxu0 %v502
    %636 = vmatprep.subr.bf16.mxu0 0
    %637 = vmatpush1.bf16.msra.mxu0 %v503
    %638 = vmatprep.subr.bf16.mxu0 0
    %639 = vmatpush1.bf16.msra.mxu0 %v504
    %640 = vmatprep.subr.bf16.mxu0 0
    %641 = vmatpush1.bf16.msra.mxu0 %v505
    %642 = vmatprep.subr.bf16.mxu0 0
    %643 = vmatpush1.bf16.msra.mxu0 %v506
    %644 = vmatprep.subr.bf16.mxu0 0
    %645 = vmatpush1.bf16.msra.mxu0 %v507
    %646 = vmatprep.subr.bf16.mxu0 0
    %647 = vmatpush1.bf16.msra.mxu0 %v508
    %648 = vmatprep.subr.bf16.mxu0 0
    %649 = vmatpush1.bf16.msra.mxu0 %v509
    %650 = vmatprep.subr.bf16.mxu0 0
    %651 = vmatpush1.bf16.msra.mxu0 %v510
    %652 = vmatprep.subr.bf16.mxu0 0
    %653 = vmatpush1.bf16.msra.mxu0 %v511
    %654 = vmatprep.subr.bf16.mxu0 0
    %655 = vmatpush1.bf16.msra.mxu0 %v512
    %656 = vmatprep.subr.bf16.mxu0 0
    %657 = vmatpush1.bf16.msra.mxu0 %v513
    %658 = vmatprep.mubr.bf16.mxu0 %v227
    %659 = vmatmul.mubr.bf16.gmra.mrb[0].mxu0 %v226
    %v660 = vpop.f32.mrb[0].mxu0
    %v661 = vadd.f32 0.0, %v660
    %v662 = vpop.f32.mrb[0].mxu0
    %v663 = vpop.f32.mrb[0].mxu0
    %v664 = vadd.f32 0.0, %v663
    %v665 = vpop.f32.mrb[0].mxu0
    %666 = vdwg.mxu0
    %667 = vmatprep.subr.bf16.mxu0 0
    %668 = vmatpush1.bf16.msra.mxu0 %v514
    %669 = vmatprep.subr.bf16.mxu0 0
    %670 = vmatpush1.bf16.msra.mxu0 %v515
    %671 = vmatprep.subr.bf16.mxu0 0
    %672 = vmatpush1.bf16.msra.mxu0 %v516
    %673 = vmatprep.subr.bf16.mxu0 0
    %674 = vmatpush1.bf16.msra.mxu0 %v517
    %675 = vmatprep.subr.bf16.mxu0 0
    %676 = vmatpush1.bf16.msra.mxu0 %v518
    %677 = vmatprep.subr.bf16.mxu0 0
    %678 = vmatpush1.bf16.msra.mxu0 %v519
    %679 = vmatprep.subr.bf16.mxu0 0
    %680 = vmatpush1.bf16.msra.mxu0 %v520
    %681 = vmatprep.subr.bf16.mxu0 0
    %682 = vmatpush1.bf16.msra.mxu0 %v521
    %683 = vmatprep.subr.bf16.mxu0 0
    %684 = vmatpush1.bf16.msra.mxu0 %v522
    %685 = vmatprep.subr.bf16.mxu0 0
    %686 = vmatpush1.bf16.msra.mxu0 %v523
    %687 = vmatprep.subr.bf16.mxu0 0
    %688 = vmatpush1.bf16.msra.mxu0 %v524
    %689 = vmatprep.subr.bf16.mxu0 0
    %690 = vmatpush1.bf16.msra.mxu0 %v525
    %691 = vmatprep.subr.bf16.mxu0 0
    %692 = vmatpush1.bf16.msra.mxu0 %v526
    %693 = vmatprep.subr.bf16.mxu0 0
    %694 = vmatpush1.bf16.msra.mxu0 %v527
    %695 = vmatprep.subr.bf16.mxu0 0
    %696 = vmatpush1.bf16.msra.mxu0 %v528
    %697 = vmatprep.subr.bf16.mxu0 0
    %698 = vmatpush1.bf16.msra.mxu0 %v529
    %699 = vmatprep.mubr.bf16.mxu0 %v229
    %700 = vmatmul.mubr.bf16.gmra.mrb[0].mxu0 %v228
    %v701 = vpop.f32.mrb[0].mxu0
    %v702 = vadd.f32 %v661, %v701
    %v703 = vpop.f32.mrb[0].mxu0
    %v704 = vpop.f32.mrb[0].mxu0
    %v705 = vadd.f32 %v664, %v704
    %v706 = vpop.f32.mrb[0].mxu0
    %707 = vdwg.mxu0
    %708 = vmatprep.subr.bf16.mxu0 0
    %709 = vmatpush1.bf16.msra.mxu0 %v530
    %710 = vmatprep.subr.bf16.mxu0 0
    %711 = vmatpush1.bf16.msra.mxu0 %v531
    %712 = vmatprep.subr.bf16.mxu0 0
    %713 = vmatpush1.bf16.msra.mxu0 %v532
    %714 = vmatprep.subr.bf16.mxu0 0
    %715 = vmatpush1.bf16.msra.mxu0 %v533
    %716 = vmatprep.subr.bf16.mxu0 0
    %717 = vmatpush1.bf16.msra.mxu0 %v534
    %718 = vmatprep.subr.bf16.mxu0 0
    %719 = vmatpush1.bf16.msra.mxu0 %v535
    %720 = vmatprep.subr.bf16.mxu0 0
    %721 = vmatpush1.bf16.msra.mxu0 %v536
    %722 = vmatprep.subr.bf16.mxu0 0
    %723 = vmatpush1.bf16.msra.mxu0 %v537
    %724 = vmatprep.subr.bf16.mxu0 0
    %725 = vmatpush1.bf16.msra.mxu0 %v538
    %726 = vmatprep.subr.bf16.mxu0 0
    %727 = vmatpush1.bf16.msra.mxu0 %v539
    %728 = vmatprep.subr.bf16.mxu0 0
    %729 = vmatpush1.bf16.msra.mxu0 %v540
    %730 = vmatprep.subr.bf16.mxu0 0
    %731 = vmatpush1.bf16.msra.mxu0 %v541
    %732 = vmatprep.subr.bf16.mxu0 0
    %733 = vmatpush1.bf16.msra.mxu0 %v542
    %734 = vmatprep.subr.bf16.mxu0 0
    %735 = vmatpush1.bf16.msra.mxu0 %v543
    %736 = vmatprep.subr.bf16.mxu0 0
    %737 = vmatpush1.bf16.msra.mxu0 %v544
    %738 = vmatprep.subr.bf16.mxu0 0
    %739 = vmatpush1.bf16.msra.mxu0 %v545
    %740 = vmatprep.mubr.bf16.mxu0 %v231
    %741 = vmatmul.mubr.bf16.gmra.mrb[0].mxu0 %v230
    %v742 = vpop.f32.mrb[0].mxu0
    %v743 = vadd.f32 %v702, %v742
    %v744 = vpop.f32.mrb[0].mxu0
    %v745 = vpop.f32.mrb[0].mxu0
    %v746 = vadd.f32 %v705, %v745
    %v747 = vpop.f32.mrb[0].mxu0
    %748 = vdwg.mxu0
    %749 = vmatprep.subr.bf16.mxu0 0
    %750 = vmatpush1.bf16.msra.mxu0 %v546
    %751 = vmatprep.subr.bf16.mxu0 0
    %752 = vmatpush1.bf16.msra.mxu0 %v547
    %753 = vmatprep.subr.bf16.mxu0 0
    %754 = vmatpush1.bf16.msra.mxu0 %v548
    %755 = vmatprep.subr.bf16.mxu0 0
    %756 = vmatpush1.bf16.msra.mxu0 %v549
    %757 = vmatprep.subr.bf16.mxu0 0
    %758 = vmatpush1.bf16.msra.mxu0 %v550
    %759 = vmatprep.subr.bf16.mxu0 0
    %760 = vmatpush1.bf16.msra.mxu0 %v551
    %761 = vmatprep.subr.bf16.mxu0 0
    %762 = vmatpush1.bf16.msra.mxu0 %v552
    %763 = vmatprep.subr.bf16.mxu0 0
    %764 = vmatpush1.bf16.msra.mxu0 %v553
    %765 = vmatprep.subr.bf16.mxu0 0
    %766 = vmatpush1.bf16.msra.mxu0 %v554
    %767 = vmatprep.subr.bf16.mxu0 0
    %768 = vmatpush1.bf16.msra.mxu0 %v555
    %769 = vmatprep.subr.bf16.mxu0 0
    %770 = vmatpush1.bf16.msra.mxu0 %v556
    %771 = vmatprep.subr.bf16.mxu0 0
    %772 = vmatpush1.bf16.msra.mxu0 %v557
    %773 = vmatprep.subr.bf16.mxu0 0
    %774 = vmatpush1.bf16.msra.mxu0 %v558
    %775 = vmatprep.subr.bf16.mxu0 0
    %776 = vmatpush1.bf16.msra.mxu0 %v559
    %777 = vmatprep.subr.bf16.mxu0 0
    %778 = vmatpush1.bf16.msra.mxu0 %v560
    %779 = vmatprep.subr.bf16.mxu0 0
    %780 = vmatpush1.bf16.msra.mxu0 %v561
    %781 = vmatprep.mubr.bf16.mxu0 %v233
    %782 = vmatmul.mubr.bf16.gmra.mrb[0].mxu0 %v232
    %v783 = vpop.f32.mrb[0].mxu0
    %v784 = vadd.f32 %v743, %v783
    %v785 = vpop.f32.mrb[0].mxu0
    %v786 = vpop.f32.mrb[0].mxu0
    %v787 = vadd.f32 %v746, %v786
    %v788 = vpop.f32.mrb[0].mxu0
    %789 = vdwg.mxu0
    %p790 = scmp.eq.s32.totalorder 0, 0
    // Predicated region
    $region38: #{tpu_custom_call.1} parent=1 // pred_check
      %p791 = pneg %p790
    $region39: #{tpu_custom_call.1} parent=1 // pred_check_branch
      %793 = sbr.rel (%p791) target = $region41
    $region40: #{tpu_custom_call.1} parent=1 // pred_region
      %794 = vst [vmem:[#allocation2] sm:$0xff] %v784
      %795 = vst [vmem:[#allocation2 + $0x8] sm:$0xff] %v787
    $region41: #{tpu_custom_call.1} parent=1 // pred_fallthru
      _
    %p796 = scmp.gt.s32.totalorder 0, 0
    // Predicated region
    $region42: #{tpu_custom_call.1} parent=1 // pred_check
      %p797 = pneg %p796
    $region43: #{tpu_custom_call.1} parent=1 // pred_check_branch
      %799 = sbr.rel (%p797) target = $region45
    $region44: #{tpu_custom_call.1} parent=1 // pred_region
      %v800 = vld [vmem:[#allocation2] sm:$0xff]
      %v801 = vld [vmem:[#allocation2 + $0x8] sm:$0xff]
      %v802 = vadd.f32 %v800, %v784
      %v803 = vadd.f32 %v801, %v787
      %804 = vst [vmem:[#allocation2] sm:$0xff] %v802
      %805 = vst [vmem:[#allocation2 + $0x8] sm:$0xff] %v803
    $region45: #{tpu_custom_call.1} parent=1 // pred_fallthru
      _
    // Predicated region
    $region46: #{tpu_custom_call.1} parent=1 // pred_check
      %p806 = pneg %p790
    $region47: #{tpu_custom_call.1} parent=1 // pred_check_branch
      %808 = sbr.rel (%p806) target = $region49
    $region48: #{tpu_custom_call.1} parent=1 // pred_region
      %v809 = vld [vmem:[#allocation2] sm:$0xff]
      %v810 = vld [vmem:[#allocation2 + $0x8] sm:$0xff]
      %v811 = vld [vmem:[%s2] sm:$0x1]
      %v813 = vlaneseq
      %v814 = vshrl.u32 %v813, 7
      %v815 = vsub.s32 0, %v814
      %v816 = vrot.slane %v811, %v815
      %v818 = vadd.f32 %v809, %v816
      %v819 = vadd.f32 %v810, %v816
      %v820 = vld [vmem:[%s3] sm:$0xff]
      %vm821 = vcmask 130048
      %v823 = vsel %vm821, %v820, 0
      %825 = vmatprep.subr.mxu0 0.0
      %826 = vmatpush1.msra.mxu0 %v818
      %827 = vmatprep.subr.mxu0 0.0
      %828 = vmatpush1.msra.mxu0 %v819
      %829 = vmatprep.subr.mxu0 0.0
      %830 = vmatpush1.msra.mxu0 0.0
      %831 = vmatprep.subr.mxu0 0.0
      %832 = vmatpush1.msra.mxu0 0.0
      %833 = vmatprep.subr.mxu0 0.0
      %834 = vmatpush1.msra.mxu0 0.0
      %835 = vmatprep.subr.mxu0 0.0
      %836 = vmatpush1.msra.mxu0 0.0
      %837 = vmatprep.subr.mxu0 0.0
      %838 = vmatpush1.msra.mxu0 0.0
      %839 = vmatprep.subr.mxu0 0.0
      %840 = vmatpush1.msra.mxu0 0.0
      %841 = vmatprep.subr.mxu0 0.0
      %842 = vmatpush1.msra.mxu0 0.0
      %843 = vmatprep.subr.mxu0 0.0
      %844 = vmatpush1.msra.mxu0 0.0
      %845 = vmatprep.subr.mxu0 0.0
      %846 = vmatpush1.msra.mxu0 0.0
      %847 = vmatprep.subr.mxu0 0.0
      %848 = vmatpush1.msra.mxu0 0.0
      %849 = vmatprep.subr.mxu0 0.0
      %850 = vmatpush1.msra.mxu0 0.0
      %851 = vmatprep.subr.mxu0 0.0
      %852 = vmatpush1.msra.mxu0 0.0
      %853 = vmatprep.subr.mxu0 0.0
      %854 = vmatpush1.msra.mxu0 0.0
      %855 = vmatprep.subr.mxu0 0.0
      %856 = vmatpush1.msra.mxu0 0.0
      %857 = vmatprep.subr.mxu0 0.0
      %858 = vmatpush1.msra.mxu0 0.0
      %859 = vmatprep.subr.mxu0 0.0
      %860 = vmatpush1.msra.mxu0 0.0
      %861 = vmatprep.subr.mxu0 0.0
      %862 = vmatpush1.msra.mxu0 0.0
      %863 = vmatprep.subr.mxu0 0.0
      %864 = vmatpush1.msra.mxu0 0.0
      %865 = vmatprep.subr.mxu0 0.0
      %866 = vmatpush1.msra.mxu0 0.0
      %867 = vmatprep.subr.mxu0 0.0
      %868 = vmatpush1.msra.mxu0 0.0
      %869 = vmatprep.subr.mxu0 0.0
      %870 = vmatpush1.msra.mxu0 0.0
      %871 = vmatprep.subr.mxu0 0.0
      %872 = vmatpush1.msra.mxu0 0.0
      %873 = vmatprep.subr.mxu0 0.0
      %874 = vmatpush1.msra.mxu0 0.0
      %875 = vmatprep.subr.mxu0 0.0
      %876 = vmatpush1.msra.mxu0 0.0
      %877 = vmatprep.subr.mxu0 0.0
      %878 = vmatpush1.msra.mxu0 0.0
      %879 = vmatprep.subr.mxu0 0.0
      %880 = vmatpush1.msra.mxu0 0.0
      %881 = vmatprep.subr.mxu0 0.0
      %882 = vmatpush1.msra.mxu0 0.0
      %883 = vmatprep.subr.mxu0 0.0
      %884 = vmatpush1.msra.mxu0 0.0
      %885 = vmatprep.subr.mxu0 0.0
      %886 = vmatpush1.msra.mxu0 0.0
      %887 = vmatprep.subr.mxu0 0.0
      %888 = vmatpush1.msra.mxu0 0.0
      %889 = vmatprep.mubr.f32.mxu0 0.0
      %890 = vmatmul.mubr.f32.gmra.mrb[0].mxu0 %v823
      %v891 = vpop.f32.mrb[0].mxu0
      %v892 = vadd.f32 0.0, %v891
      %v893 = vpop.f32.mrb[0].mxu0
      %894 = vdwg.mxu0
      %v895 = vld [vmem:[#allocation8] sm:$0xff]
      %v896 = vld [vmem:[#allocation8 + $0x8] sm:$0xff]
      %v897 = vld [vmem:[#allocation8 + $0x10] sm:$0xff]
      %v898 = vld [vmem:[#allocation8 + $0x18] sm:$0xff]
      %v899 = vld [vmem:[#allocation8 + $0x20] sm:$0xff]
      %v900 = vld [vmem:[#allocation8 + $0x28] sm:$0xff]
      %v901 = vld [vmem:[#allocation8 + $0x30] sm:$0xff]
      %v902 = vld [vmem:[#allocation8 + $0x38] sm:$0xff]
      %v903 = vld [vmem:[#allocation8 + $0x40] sm:$0xff]
      %v904 = vld [vmem:[#allocation8 + $0x48] sm:$0xff]
      %v905 = vld [vmem:[#allocation8 + $0x50] sm:$0xff]
      %v906 = vld [vmem:[#allocation8 + $0x58] sm:$0xff]
      %v907 = vld [vmem:[#allocation8 + $0x60] sm:$0xff]
      %v908 = vld [vmem:[#allocation8 + $0x68] sm:$0xff]
      %v909 = vld [vmem:[#allocation8 + $0x70] sm:$0xff]
      %v910 = vld [vmem:[#allocation8 + $0x78] sm:$0xff]
      %p911 = scmp.eq.s32.totalorder 0, 0
      %s912 = scalar_select %p911, 1, 0
      %s913 = scvt.s32.f32 %s912
      %v914 = vld [vmem:[%s5] sm:$0x1]
      %v915 = vstv %s913
      %v916 = vmul.f32 %v915, %v914
      %v918 = vlaneseq
      %v919 = vshrl.u32 %v918, 7
      %v920 = vsub.s32 0, %v919
      %v921 = vrot.slane %v916, %v920
      %923 = vmatprep.subr.mxu0 0.0
      %924 = vmatpush1.msra.mxu0 %v895
      %925 = vmatprep.subr.mxu0 0.0
      %926 = vmatpush1.msra.mxu0 %v896
      %927 = vmatprep.subr.mxu0 0.0
      %928 = vmatpush1.msra.mxu0 %v897
      %929 = vmatprep.subr.mxu0 0.0
      %930 = vmatpush1.msra.mxu0 %v898
      %931 = vmatprep.subr.mxu0 0.0
      %932 = vmatpush1.msra.mxu0 %v899
      %933 = vmatprep.subr.mxu0 0.0
      %934 = vmatpush1.msra.mxu0 %v900
      %935 = vmatprep.subr.mxu0 0.0
      %936 = vmatpush1.msra.mxu0 %v901
      %937 = vmatprep.subr.mxu0 0.0
      %938 = vmatpush1.msra.mxu0 %v902
      %939 = vmatprep.subr.mxu0 0.0
      %940 = vmatpush1.msra.mxu0 %v903
      %941 = vmatprep.subr.mxu0 0.0
      %942 = vmatpush1.msra.mxu0 %v904
      %943 = vmatprep.subr.mxu0 0.0
      %944 = vmatpush1.msra.mxu0 %v905
      %945 = vmatprep.subr.mxu0 0.0
      %946 = vmatpush1.msra.mxu0 %v906
      %947 = vmatprep.subr.mxu0 0.0
      %948 = vmatpush1.msra.mxu0 %v907
      %949 = vmatprep.subr.mxu0 0.0
      %950 = vmatpush1.msra.mxu0 %v908
      %951 = vmatprep.subr.mxu0 0.0
      %952 = vmatpush1.msra.mxu0 %v909
      %953 = vmatprep.subr.mxu0 0.0
      %954 = vmatpush1.msra.mxu0 %v910
      %955 = vmatprep.subr.mxu0 0.0
      %956 = vmatpush1.msra.mxu0 0.0
      %957 = vmatprep.subr.mxu0 0.0
      %958 = vmatpush1.msra.mxu0 0.0
      %959 = vmatprep.subr.mxu0 0.0
      %960 = vmatpush1.msra.mxu0 0.0
      %961 = vmatprep.subr.mxu0 0.0
      %962 = vmatpush1.msra.mxu0 0.0
      %963 = vmatprep.subr.mxu0 0.0
      %964 = vmatpush1.msra.mxu0 0.0
      %965 = vmatprep.subr.mxu0 0.0
      %966 = vmatpush1.msra.mxu0 0.0
      %967 = vmatprep.subr.mxu0 0.0
      %968 = vmatpush1.msra.mxu0 0.0
      %969 = vmatprep.subr.mxu0 0.0
      %970 = vmatpush1.msra.mxu0 0.0
      %971 = vmatprep.subr.mxu0 0.0
      %972 = vmatpush1.msra.mxu0 0.0
      %973 = vmatprep.subr.mxu0 0.0
      %974 = vmatpush1.msra.mxu0 0.0
      %975 = vmatprep.subr.mxu0 0.0
      %976 = vmatpush1.msra.mxu0 0.0
      %977 = vmatprep.subr.mxu0 0.0
      %978 = vmatpush1.msra.mxu0 0.0
      %979 = vmatprep.subr.mxu0 0.0
      %980 = vmatpush1.msra.mxu0 0.0
      %981 = vmatprep.subr.mxu0 0.0
      %982 = vmatpush1.msra.mxu0 0.0
      %983 = vmatprep.subr.mxu0 0.0
      %984 = vmatpush1.msra.mxu0 0.0
      %985 = vmatprep.subr.mxu0 0.0
      %986 = vmatpush1.msra.mxu0 0.0
      %987 = vmatprep.mubr.f32.mxu0 0.0
      %988 = vmatmul.mubr.f32.gmra.mrb[0].mxu0 %v892
      %v989 = vpop.f32.mrb[0].mxu0
      %v990 = vadd.f32 %v921, %v989
      %v991 = vpop.f32.mrb[0].mxu0
      %992 = vdwg.mxu0
      %993 = vst [vmem:[#allocation9] sm:$0xff] %v990
    $region49: #{tpu_custom_call.1} parent=1 // pred_fallthru
      _
    // Predicated region
    $region50: #{tpu_custom_call.1} parent=1 // pred_check
      _
    $region51: #{tpu_custom_call.1} parent=1 // pred_check_branch
      %995 = sbr.rel (0) target = $region53
    $region52: #{tpu_custom_call.1} parent=1 // pred_region
      %s997 = ssub.s32 128, 128
      %998 = vsyncadd [#allocation5], %s997
      %s1000 = sshll.u32 [#allocation9], 4
      %s1001 = int_to_ptr.vmem [resolvable:$true] %s1000
      %1003 = dma.vmem_to_hbm [thread:$0]  %s1001, 128, %s6, [#allocation5]
    $region53: #{tpu_custom_call.1} parent=1 // pred_fallthru
      _
    // Predicated region
    $region54: #{tpu_custom_call.1} parent=1 // pred_check
      _
    $region55: #{tpu_custom_call.1} parent=1 // pred_check_branch
      %1005 = sbr.rel (0) target = $region57
    $region56: #{tpu_custom_call.1} parent=1 // pred_region
      %1006 = dma.done [#allocation5], 128
    $region57: #{tpu_custom_call.1} parent=1 // pred_fallthru
      _
    %1007 = vsyncpa [#allocation4], 1
    %1008 = vsyncpa [#allocation7], 1
    %1009 = vsyncpa [#allocation5], 1

// kernel: tpu_custom_call.1
$region0: #{tpu_custom_call.1}
  #allocation0 [shape = 'u32[]', space=smem, size = 0x4, offset = 0x4, fixed_abs, tag = 'smem constant byte address 0x4 - core index']
  #allocation1 [shape = 'u32[144,128]{1,0:T(1,128)}', space=vmem, size = 0x12000, scoped, tag = 'internal scratch']
  #allocation2 [shape = 'f32[16,128]{1,0:T(8,128)}', space=vmem, size = 0x2000, scoped, tag = 'scratch operand']
  %s0 = inlined_call_operand.hbm [shape: bf16[16,1024], index: 0, kind: input, shape index: {}]
  %s1 = inlined_call_operand.hbm [shape: bf16[1024,128], index: 1, kind: input, shape index: {}]
  %s2 = inlined_call_operand.vmem [shape: f32[1,128], index: 2, kind: input, shape index: {}]
  %s3 = inlined_call_operand.vmem [shape: f32[8,16], index: 3, kind: input, shape index: {}]
  %s4 = inlined_call_operand.hbm [shape: f32[128,128], index: 4, kind: input, shape index: {}]
  %s5 = inlined_call_operand.vmem [shape: f32[1,128], index: 5, kind: input, shape index: {}]
  %s6 = inlined_call_operand.hbm [shape: f32[1,8,128], index: 6, kind: output, shape index: {}]
  %s7 = sld [smem:[#allocation0]]
  $region58: #{tpu_custom_call.1} parent=0
    _
  %s9 = ssub.s32 1, %s7
  %s10 = scalar_select 0, %s9, %s7
  $region1: #{tpu_custom_call.1} parent=0
    #allocation3 [shape = 'u8[32768]{0}', space=vmem, size = 0x8000, scoped, tag = 'input window, operand 0, single buffered']
    #allocation4 [shape = 's32[1]{0}', space=sflag, size = 0x4, scoped, tag = 'scoped memory for tpu_custom_call.1']
    #allocation5 [shape = 's32[1]{0}', space=sflag, size = 0x4, scoped, tag = 'scoped memory for tpu_custom_call.1']
    #allocation6 [shape = 'u8[262144]{0}', space=vmem, size = 0x40000, scoped, tag = 'input window, operand 1, single buffered']
    #allocation7 [shape = 's32[1]{0}', space=sflag, size = 0x4, scoped, tag = 'scoped memory for tpu_custom_call.1']
    #allocation8 [shape = 'u8[65536]{0}', space=vmem, size = 0x10000, scoped, tag = 'input window, operand 4, single buffered']
    #allocation9 [shape = 'u8[4096]{0}', space=vmem, size = 0x1000, scoped, tag = 'output window, operand 0, single buffered']
    %11 = vsyncpa [#allocation4], 0
    %12 = vsyncpa [#allocation7], 0
    %13 = vsyncpa [#allocation5], 0
    // Predicated region
    $region2: #{tpu_custom_call.1} parent=1 // pred_check
      _
    $region3: #{tpu_custom_call.1} parent=1 // pred_check_branch
      %15 = sbr.rel (0) target = $region5
    $region4: #{tpu_custom_call.1} parent=1 // pred_region
      %s17 = ssub.s32 1024, 1024
      %18 = vsyncadd [#allocation4], %s17
      %s19 = sshll.u32 [#allocation3], 4
      %s20 = int_to_ptr.vmem [resolvable:$true] %s19
      %25 = dma.hbm_to_vmem [thread:$0]  %s0, 1024, %s20, [#allocation4], 512, 512, 32
    $region5: #{tpu_custom_call.1} parent=1 // pred_fallthru
      _
    // Predicated region
    $region6: #{tpu_custom_call.1} parent=1 // pred_check
      _
    $region7: #{tpu_custom_call.1} parent=1 // pred_check_branch
      %27 = sbr.rel (0) target = $region9
    $region8: #{tpu_custom_call.1} parent=1 // pred_region
      %s29 = ssub.s32 8192, 8192
      %30 = vsyncadd [#allocation7], %s29
      %s31 = sshll.u32 [#allocation6], 4
      %s32 = int_to_ptr.vmem [resolvable:$true] %s31
      %37 = dma.hbm_to_vmem [thread:$0]  %s1, 8192, %s32, [#allocation7], 64, 64, 4
    $region9: #{tpu_custom_call.1} parent=1 // pred_fallthru
      _
    // Predicated region
    $region10: #{tpu_custom_call.1} parent=1 // pred_check
      _
    $region11: #{tpu_custom_call.1} parent=1 // pred_check_branch
      %39 = sbr.rel (0) target = $region13
    $region12: #{tpu_custom_call.1} parent=1 // pred_region
      _
    $region13: #{tpu_custom_call.1} parent=1 // pred_fallthru
      _
    // Predicated region
    $region14: #{tpu_custom_call.1} parent=1 // pred_check
      _
    $region15: #{tpu_custom_call.1} parent=1 // pred_check_branch
      %41 = sbr.rel (0) target = $region17
    $region16: #{tpu_custom_call.1} parent=1 // pred_region
      _
    $region17: #{tpu_custom_call.1} parent=1 // pred_fallthru
      _
    // Predicated region
    $region18: #{tpu_custom_call.1} parent=1 // pred_check
      _
    $region19: #{tpu_custom_call.1} parent=1 // pred_check_branch
      %43 = sbr.rel (0) target = $region21
    $region20: #{tpu_custom_call.1} parent=1 // pred_region
      %s45 = ssub.s32 2048, 2048
      %46 = vsyncadd [#allocation7], %s45
      %s47 = sshll.u32 [#allocation8], 4
      %s48 = int_to_ptr.vmem [resolvable:$true] %s47
      %53 = dma.hbm_to_vmem [thread:$0]  %s4, 2048, %s48, [#allocation7], 128, 128, 8
    $region21: #{tpu_custom_call.1} parent=1 // pred_fallthru
      _
    // Predicated region
    $region22: #{tpu_custom_call.1} parent=1 // pred_check
      _
    $region23: #{tpu_custom_call.1} parent=1 // pred_check_branch
      %55 = sbr.rel (0) target = $region25
    $region24: #{tpu_custom_call.1} parent=1 // pred_region
      _
    $region25: #{tpu_custom_call.1} parent=1 // pred_fallthru
      _
    // Predicated region
    $region26: #{tpu_custom_call.1} parent=1 // pred_check
      _
    $region27: #{tpu_custom_call.1} parent=1 // pred_check_branch
      %57 = sbr.rel (0) target = $region29
    $region28: #{tpu_custom_call.1} parent=1 // pred_region
      %58 = dma.done [#allocation4], 1024
    $region29: #{tpu_custom_call.1} parent=1 // pred_fallthru
      _
    // Predicated region
    $region30: #{tpu_custom_call.1} parent=1 // pred_check
      _
    $region31: #{tpu_custom_call.1} parent=1 // pred_check_branch
      %60 = sbr.rel (0) target = $region33
    $region32: #{tpu_custom_call.1} parent=1 // pred_region
      %61 = dma.done [#allocation7], 8192
    $region33: #{tpu_custom_call.1} parent=1 // pred_fallthru
      _
    // Predicated region
    $region34: #{tpu_custom_call.1} parent=1 // pred_check
      _
    $region35: #{tpu_custom_call.1} parent=1 // pred_check_branch
      %63 = sbr.rel (0) target = $region37
    $region36: #{tpu_custom_call.1} parent=1 // pred_region
      %64 = dma.done [#allocation7], 2048
    $region37: #{tpu_custom_call.1} parent=1 // pred_fallthru
      _
    %v66 = vld [vmem:[#allocation3] sm:$0xff]
    %v67 = vld [vmem:[#allocation3 + $0x8] sm:$0xff]
    %v68 = vld [vmem:[#allocation3 + $0x10] sm:$0xff]
    %v69 = vld [vmem:[#allocation3 + $0x18] sm:$0xff]
    %v70 = vld [vmem:[#allocation3 + $0x20] sm:$0xff]
    %v71 = vld [vmem:[#allocation3 + $0x28] sm:$0xff]
    %v72 = vld [vmem:[#allocation3 + $0x30] sm:$0xff]
    %v73 = vld [vmem:[#allocation3 + $0x38] sm:$0xff]
    %v74 = vld [vmem:[#allocation6] sm:$0xf]
    %v75 = vld [vmem:[#allocation6 + $0x4] sm:$0xf]
    %v76 = vld [vmem:[#allocation6 + $0x8] sm:$0xf]
    %v77 = vld [vmem:[#allocation6 + $0xc] sm:$0xf]
    %v78 = vld [vmem:[#allocation6 + $0x10] sm:$0xf]
    %v79 = vld [vmem:[#allocation6 + $0x14] sm:$0xf]
    %v80 = vld [vmem:[#allocation6 + $0x18] sm:$0xf]
    %v81 = vld [vmem:[#allocation6 + $0x1c] sm:$0xf]
    %v82 = vld [vmem:[#allocation6 + $0x20] sm:$0xf]
    %v83 = vld [vmem:[#allocation6 + $0x24] sm:$0xf]
    %v84 = vld [vmem:[#allocation6 + $0x28] sm:$0xf]
    %v85 = vld [vmem:[#allocation6 + $0x2c] sm:$0xf]
    %v86 = vld [vmem:[#allocation6 + $0x30] sm:$0xf]
    %v87 = vld [vmem:[#allocation6 + $0x34] sm:$0xf]
    %v88 = vld [vmem:[#allocation6 + $0x38] sm:$0xf]
    %v89 = vld [vmem:[#allocation6 + $0x3c] sm:$0xf]
    %v90 = vld [vmem:[#allocation6 + $0x40] sm:$0xf]
    %v91 = vld [vmem:[#allocation6 + $0x44] sm:$0xf]
    %v92 = vld [vmem:[#allocation6 + $0x48] sm:$0xf]
    %v93 = vld [vmem:[#allocation6 + $0x4c] sm:$0xf]
    %v94 = vld [vmem:[#allocation6 + $0x50] sm:$0xf]
    %v95 = vld [vmem:[#allocation6 + $0x54] sm:$0xf]
    %v96 = vld [vmem:[#allocation6 + $0x58] sm:$0xf]
    %v97 = vld [vmem:[#allocation6 + $0x5c] sm:$0xf]
    %v98 = vld [vmem:[#allocation6 + $0x60] sm:$0xf]
    %v99 = vld [vmem:[#allocation6 + $0x64] sm:$0xf]
    %v100 = vld [vmem:[#allocation6 + $0x68] sm:$0xf]
    %v101 = vld [vmem:[#allocation6 + $0x6c] sm:$0xf]
    %v102 = vld [vmem:[#allocation6 + $0x70] sm:$0xf]
    %v103 = vld [vmem:[#allocation6 + $0x74] sm:$0xf]
    %v104 = vld [vmem:[#allocation6 + $0x78] sm:$0xf]
    %v105 = vld [vmem:[#allocation6 + $0x7c] sm:$0xf]
    %v106 = vld [vmem:[#allocation6 + $0x80] sm:$0xf]
    %v107 = vld [vmem:[#allocation6 + $0x84] sm:$0xf]
    %v108 = vld [vmem:[#allocation6 + $0x88] sm:$0xf]
    %v109 = vld [vmem:[#allocation6 + $0x8c] sm:$0xf]
    %v110 = vld [vmem:[#allocation6 + $0x90] sm:$0xf]
    %v111 = vld [vmem:[#allocation6 + $0x94] sm:$0xf]
    %v112 = vld [vmem:[#allocation6 + $0x98] sm:$0xf]
    %v113 = vld [vmem:[#allocation6 + $0x9c] sm:$0xf]
    %v114 = vld [vmem:[#allocation6 + $0xa0] sm:$0xf]
    %v115 = vld [vmem:[#allocation6 + $0xa4] sm:$0xf]
    %v116 = vld [vmem:[#allocation6 + $0xa8] sm:$0xf]
    %v117 = vld [vmem:[#allocation6 + $0xac] sm:$0xf]
    %v118 = vld [vmem:[#allocation6 + $0xb0] sm:$0xf]
    %v119 = vld [vmem:[#allocation6 + $0xb4] sm:$0xf]
    %v120 = vld [vmem:[#allocation6 + $0xb8] sm:$0xf]
    %v121 = vld [vmem:[#allocation6 + $0xbc] sm:$0xf]
    %v122 = vld [vmem:[#allocation6 + $0xc0] sm:$0xf]
    %v123 = vld [vmem:[#allocation6 + $0xc4] sm:$0xf]
    %v124 = vld [vmem:[#allocation6 + $0xc8] sm:$0xf]
    %v125 = vld [vmem:[#allocation6 + $0xcc] sm:$0xf]
    %v126 = vld [vmem:[#allocation6 + $0xd0] sm:$0xf]
    %v127 = vld [vmem:[#allocation6 + $0xd4] sm:$0xf]
    %v128 = vld [vmem:[#allocation6 + $0xd8] sm:$0xf]
    %v129 = vld [vmem:[#allocation6 + $0xdc] sm:$0xf]
    %v130 = vld [vmem:[#allocation6 + $0xe0] sm:$0xf]
    %v131 = vld [vmem:[#allocation6 + $0xe4] sm:$0xf]
    %v132 = vld [vmem:[#allocation6 + $0xe8] sm:$0xf]
    %v133 = vld [vmem:[#allocation6 + $0xec] sm:$0xf]
    %v134 = vld [vmem:[#allocation6 + $0xf0] sm:$0xf]
    %v135 = vld [vmem:[#allocation6 + $0xf4] sm:$0xf]
    %v136 = vld [vmem:[#allocation6 + $0xf8] sm:$0xf]
    %v137 = vld [vmem:[#allocation6 + $0xfc] sm:$0xf]
    %v138 = vld [vmem:[#allocation6 + $0x100] sm:$0xf]
    %v139 = vld [vmem:[#allocation6 + $0x104] sm:$0xf]
    %v140 = vld [vmem:[#allocation6 + $0x108] sm:$0xf]
    %v141 = vld [vmem:[#allocation6 + $0x10c] sm:$0xf]
    %v142 = vld [vmem:[#allocation6 + $0x110] sm:$0xf]
    %v143 = vld [vmem:[#allocation6 + $0x114] sm:$0xf]
    %v144 = vld [vmem:[#allocation6 + $0x118] sm:$0xf]
    %v145 = vld [vmem:[#allocation6 + $0x11c] sm:$0xf]
    %v146 = vld [vmem:[#allocation6 + $0x120] sm:$0xf]
    %v147 = vld [vmem:[#allocation6 + $0x124] sm:$0xf]
    %v148 = vld [vmem:[#allocation6 + $0x128] sm:$0xf]
    %v149 = vld [vmem:[#allocation6 + $0x12c] sm:$0xf]
    %v150 = vld [vmem:[#allocation6 + $0x130] sm:$0xf]
    %v151 = vld [vmem:[#allocation6 + $0x134] sm:$0xf]
    %v152 = vld [vmem:[#allocation6 + $0x138] sm:$0xf]
    %v153 = vld [vmem:[#allocation6 + $0x13c] sm:$0xf]
    %v154 = vld [vmem:[#allocation6 + $0x140] sm:$0xf]
    %v155 = vld [vmem:[#allocation6 + $0x144] sm:$0xf]
    %v156 = vld [vmem:[#allocation6 + $0x148] sm:$0xf]
    %v157 = vld [vmem:[#allocation6 + $0x14c] sm:$0xf]
    %v158 = vld [vmem:[#allocation6 + $0x150] sm:$0xf]
    %v159 = vld [vmem:[#allocation6 + $0x154] sm:$0xf]
    %v160 = vld [vmem:[#allocation6 + $0x158] sm:$0xf]
    %v161 = vld [vmem:[#allocation6 + $0x15c] sm:$0xf]
    %v162 = vld [vmem:[#allocation6 + $0x160] sm:$0xf]
    %v163 = vld [vmem:[#allocation6 + $0x164] sm:$0xf]
    %v164 = vld [vmem:[#allocation6 + $0x168] sm:$0xf]
    %v165 = vld [vmem:[#allocation6 + $0x16c] sm:$0xf]
    %v166 = vld [vmem:[#allocation6 + $0x170] sm:$0xf]
    %v167 = vld [vmem:[#allocation6 + $0x174] sm:$0xf]
    %v168 = vld [vmem:[#allocation6 + $0x178] sm:$0xf]
    %v169 = vld [vmem:[#allocation6 + $0x17c] sm:$0xf]
    %v170 = vld [vmem:[#allocation6 + $0x180] sm:$0xf]
    %v171 = vld [vmem:[#allocation6 + $0x184] sm:$0xf]
    %v172 = vld [vmem:[#allocation6 + $0x188] sm:$0xf]
    %v173 = vld [vmem:[#allocation6 + $0x18c] sm:$0xf]
    %v174 = vld [vmem:[#allocation6 + $0x190] sm:$0xf]
    %v175 = vld [vmem:[#allocation6 + $0x194] sm:$0xf]
    %v176 = vld [vmem:[#allocation6 + $0x198] sm:$0xf]
    %v177 = vld [vmem:[#allocation6 + $0x19c] sm:$0xf]
    %v178 = vld [vmem:[#allocation6 + $0x1a0] sm:$0xf]
    %v179 = vld [vmem:[#allocation6 + $0x1a4] sm:$0xf]
    %v180 = vld [vmem:[#allocation6 + $0x1a8] sm:$0xf]
    %v181 = vld [vmem:[#allocation6 + $0x1ac] sm:$0xf]
    %v182 = vld [vmem:[#allocation6 + $0x1b0] sm:$0xf]
    %v183 = vld [vmem:[#allocation6 + $0x1b4] sm:$0xf]
    %v184 = vld [vmem:[#allocation6 + $0x1b8] sm:$0xf]
    %v185 = vld [vmem:[#allocation6 + $0x1bc] sm:$0xf]
    %v186 = vld [vmem:[#allocation6 + $0x1c0] sm:$0xf]
    %v187 = vld [vmem:[#allocation6 + $0x1c4] sm:$0xf]
    %v188 = vld [vmem:[#allocation6 + $0x1c8] sm:$0xf]
    %v189 = vld [vmem:[#allocation6 + $0x1cc] sm:$0xf]
    %v190 = vld [vmem:[#allocation6 + $0x1d0] sm:$0xf]
    %v191 = vld [vmem:[#allocation6 + $0x1d4] sm:$0xf]
    %v192 = vld [vmem:[#allocation6 + $0x1d8] sm:$0xf]
    %v193 = vld [vmem:[#allocation6 + $0x1dc] sm:$0xf]
    %v194 = vld [vmem:[#allocation6 + $0x1e0] sm:$0xf]
    %v195 = vld [vmem:[#allocation6 + $0x1e4] sm:$0xf]
    %v196 = vld [vmem:[#allocation6 + $0x1e8] sm:$0xf]
    %v197 = vld [vmem:[#allocation6 + $0x1ec] sm:$0xf]
    %v198 = vld [vmem:[#allocation6 + $0x1f0] sm:$0xf]
    %v199 = vld [vmem:[#allocation6 + $0x1f4] sm:$0xf]
    %v200 = vld [vmem:[#allocation6 + $0x1f8] sm:$0xf]
    %v201 = vld [vmem:[#allocation6 + $0x1fc] sm:$0xf]
    %v210 = vunpack.c.l.b16 %v66
    %v211 = vunpack.c.h.b16 %v66
    %v212 = vunpack.c.l.b16 %v67
    %v213 = vunpack.c.h.b16 %v67
    %v214 = vunpack.c.l.b16 %v68
    %v215 = vunpack.c.h.b16 %v68
    %v216 = vunpack.c.l.b16 %v69
    %v217 = vunpack.c.h.b16 %v69
    %v218 = vunpack.c.l.b16 %v70
    %v219 = vunpack.c.h.b16 %v70
    %v220 = vunpack.c.l.b16 %v71
    %v221 = vunpack.c.h.b16 %v71
    %v222 = vunpack.c.l.b16 %v72
    %v223 = vunpack.c.h.b16 %v72
    %v224 = vunpack.c.l.b16 %v73
    %v225 = vunpack.c.h.b16 %v73
    %v226 = vpack.c.b16 %v218, %v210
    %v227 = vpack.c.b16 %v219, %v211
    %v228 = vpack.c.b16 %v220, %v212
    %v229 = vpack.c.b16 %v221, %v213
    %v230 = vpack.c.b16 %v222, %v214
    %v231 = vpack.c.b16 %v223, %v215
    %v232 = vpack.c.b16 %v224, %v216
    %v233 = vpack.c.b16 %v225, %v217
    %v370 = vunpack.c.l.b16 %v74
    %v371 = vunpack.c.l.b16 %v75
    %v372 = vunpack.c.l.b16 %v76
    %v373 = vunpack.c.l.b16 %v77
    %v374 = vunpack.c.l.b16 %v78
    %v375 = vunpack.c.l.b16 %v79
    %v376 = vunpack.c.l.b16 %v80
    %v377 = vunpack.c.l.b16 %v81
    %v378 = vunpack.c.l.b16 %v82
    %v379 = vunpack.c.l.b16 %v83
    %v380 = vunpack.c.l.b16 %v84
    %v381 = vunpack.c.l.b16 %v85
    %v382 = vunpack.c.l.b16 %v86
    %v383 = vunpack.c.l.b16 %v87
    %v384 = vunpack.c.l.b16 %v88
    %v385 = vunpack.c.l.b16 %v89
    %v386 = vunpack.c.l.b16 %v90
    %v387 = vunpack.c.l.b16 %v91
    %v388 = vunpack.c.l.b16 %v92
    %v389 = vunpack.c.l.b16 %v93
    %v390 = vunpack.c.l.b16 %v94
    %v391 = vunpack.c.l.b16 %v95
    %v392 = vunpack.c.l.b16 %v96
    %v393 = vunpack.c.l.b16 %v97
    %v394 = vunpack.c.l.b16 %v98
    %v395 = vunpack.c.l.b16 %v99
    %v396 = vunpack.c.l.b16 %v100
    %v397 = vunpack.c.l.b16 %v101
    %v398 = vunpack.c.l.b16 %v102
    %v399 = vunpack.c.l.b16 %v103
    %v400 = vunpack.c.l.b16 %v104
    %v401 = vunpack.c.l.b16 %v105
    %v402 = vunpack.c.l.b16 %v106
    %v403 = vunpack.c.l.b16 %v107
    %v404 = vunpack.c.l.b16 %v108
    %v405 = vunpack.c.l.b16 %v109
    %v406 = vunpack.c.l.b16 %v110
    %v407 = vunpack.c.l.b16 %v111
    %v408 = vunpack.c.l.b16 %v112
    %v409 = vunpack.c.l.b16 %v113
    %v410 = vunpack.c.l.b16 %v114
    %v411 = vunpack.c.l.b16 %v115
    %v412 = vunpack.c.l.b16 %v116
    %v413 = vunpack.c.l.b16 %v117
    %v414 = vunpack.c.l.b16 %v118
    %v415 = vunpack.c.l.b16 %v119
    %v416 = vunpack.c.l.b16 %v120
    %v417 = vunpack.c.l.b16 %v121
    %v418 = vunpack.c.l.b16 %v122
    %v419 = vunpack.c.l.b16 %v123
    %v420 = vunpack.c.l.b16 %v124
    %v421 = vunpack.c.l.b16 %v125
    %v422 = vunpack.c.l.b16 %v126
    %v423 = vunpack.c.l.b16 %v127
    %v424 = vunpack.c.l.b16 %v128
    %v425 = vunpack.c.l.b16 %v129
    %v426 = vunpack.c.l.b16 %v130
    %v427 = vunpack.c.l.b16 %v131
    %v428 = vunpack.c.l.b16 %v132
    %v429 = vunpack.c.l.b16 %v133
    %v430 = vunpack.c.l.b16 %v134
    %v431 = vunpack.c.l.b16 %v135
    %v432 = vunpack.c.l.b16 %v136
    %v433 = vunpack.c.l.b16 %v137
    %v434 = vunpack.c.l.b16 %v138
    %v435 = vunpack.c.l.b16 %v139
    %v436 = vunpack.c.l.b16 %v140
    %v437 = vunpack.c.l.b16 %v141
    %v438 = vunpack.c.l.b16 %v142
    %v439 = vunpack.c.l.b16 %v143
    %v440 = vunpack.c.l.b16 %v144
    %v441 = vunpack.c.l.b16 %v145
    %v442 = vunpack.c.l.b16 %v146
    %v443 = vunpack.c.l.b16 %v147
    %v444 = vunpack.c.l.b16 %v148
    %v445 = vunpack.c.l.b16 %v149
    %v446 = vunpack.c.l.b16 %v150
    %v447 = vunpack.c.l.b16 %v151
    %v448 = vunpack.c.l.b16 %v152
    %v449 = vunpack.c.l.b16 %v153
    %v450 = vunpack.c.l.b16 %v154
    %v451 = vunpack.c.l.b16 %v155
    %v452 = vunpack.c.l.b16 %v156
    %v453 = vunpack.c.l.b16 %v157
    %v454 = vunpack.c.l.b16 %v158
    %v455 = vunpack.c.l.b16 %v159
    %v456 = vunpack.c.l.b16 %v160
    %v457 = vunpack.c.l.b16 %v161
    %v458 = vunpack.c.l.b16 %v162
    %v459 = vunpack.c.l.b16 %v163
    %v460 = vunpack.c.l.b16 %v164
    %v461 = vunpack.c.l.b16 %v165
    %v462 = vunpack.c.l.b16 %v166
    %v463 = vunpack.c.l.b16 %v167
    %v464 = vunpack.c.l.b16 %v168
    %v465 = vunpack.c.l.b16 %v169
    %v466 = vunpack.c.l.b16 %v170
    %v467 = vunpack.c.l.b16 %v171
    %v468 = vunpack.c.l.b16 %v172
    %v469 = vunpack.c.l.b16 %v173
    %v470 = vunpack.c.l.b16 %v174
    %v471 = vunpack.c.l.b16 %v175
    %v472 = vunpack.c.l.b16 %v176
    %v473 = vunpack.c.l.b16 %v177
    %v474 = vunpack.c.l.b16 %v178
    %v475 = vunpack.c.l.b16 %v179
    %v476 = vunpack.c.l.b16 %v180
    %v477 = vunpack.c.l.b16 %v181
    %v478 = vunpack.c.l.b16 %v182
    %v479 = vunpack.c.l.b16 %v183
    %v480 = vunpack.c.l.b16 %v184
    %v481 = vunpack.c.l.b16 %v185
    %v482 = vunpack.c.l.b16 %v186
    %v483 = vunpack.c.l.b16 %v187
    %v484 = vunpack.c.l.b16 %v188
    %v485 = vunpack.c.l.b16 %v189
    %v486 = vunpack.c.l.b16 %v190
    %v487 = vunpack.c.l.b16 %v191
    %v488 = vunpack.c.l.b16 %v192
    %v489 = vunpack.c.l.b16 %v193
    %v490 = vunpack.c.l.b16 %v194
    %v491 = vunpack.c.l.b16 %v195
    %v492 = vunpack.c.l.b16 %v196
    %v493 = vunpack.c.l.b16 %v197
    %v494 = vunpack.c.l.b16 %v198
    %v495 = vunpack.c.l.b16 %v199
    %v496 = vunpack.c.l.b16 %v200
    %v497 = vunpack.c.l.b16 %v201
    %v498 = vpack.c.b16 %v371, %v370
    %v499 = vpack.c.b16 %v373, %v372
    %v500 = vpack.c.b16 %v375, %v374
    %v501 = vpack.c.b16 %v377, %v376
    %v502 = vpack.c.b16 %v379, %v378
    %v503 = vpack.c.b16 %v381, %v380
    %v504 = vpack.c.b16 %v383, %v382
    %v505 = vpack.c.b16 %v385, %v384
    %v506 = vpack.c.b16 %v387, %v386
    %v507 = vpack.c.b16 %v389, %v388
    %v508 = vpack.c.b16 %v391, %v390
    %v509 = vpack.c.b16 %v393, %v392
    %v510 = vpack.c.b16 %v395, %v394
    %v511 = vpack.c.b16 %v397, %v396
    %v512 = vpack.c.b16 %v399, %v398
    %v513 = vpack.c.b16 %v401, %v400
    %v514 = vpack.c.b16 %v403, %v402
    %v515 = vpack.c.b16 %v405, %v404
    %v516 = vpack.c.b16 %v407, %v406
    %v517 = vpack.c.b16 %v409, %v408
    %v518 = vpack.c.b16 %v411, %v410
    %v519 = vpack.c.b16 %v413, %v412
    %v520 = vpack.c.b16 %v415, %v414
    %v521 = vpack.c.b16 %v417, %v416
    %v522 = vpack.c.b16 %v419, %v418
    %v523 = vpack.c.b16 %v421, %v420
    %v524 = vpack.c.b16 %v423, %v422
    %v525 = vpack.c.b16 %v425, %v424
    %v526 = vpack.c.b16 %v427, %v426
    %v527 = vpack.c.b16 %v429, %v428
    %v528 = vpack.c.b16 %v431, %v430
    %v529 = vpack.c.b16 %v433, %v432
    %v530 = vpack.c.b16 %v435, %v434
    %v531 = vpack.c.b16 %v437, %v436
    %v532 = vpack.c.b16 %v439, %v438
    %v533 = vpack.c.b16 %v441, %v440
    %v534 = vpack.c.b16 %v443, %v442
    %v535 = vpack.c.b16 %v445, %v444
    %v536 = vpack.c.b16 %v447, %v446
    %v537 = vpack.c.b16 %v449, %v448
    %v538 = vpack.c.b16 %v451, %v450
    %v539 = vpack.c.b16 %v453, %v452
    %v540 = vpack.c.b16 %v455, %v454
    %v541 = vpack.c.b16 %v457, %v456
    %v542 = vpack.c.b16 %v459, %v458
    %v543 = vpack.c.b16 %v461, %v460
    %v544 = vpack.c.b16 %v463, %v462
    %v545 = vpack.c.b16 %v465, %v464
    %v546 = vpack.c.b16 %v467, %v466
    %v547 = vpack.c.b16 %v469, %v468
    %v548 = vpack.c.b16 %v471, %v470
    %v549 = vpack.c.b16 %v473, %v472
    %v550 = vpack.c.b16 %v475, %v474
    %v551 = vpack.c.b16 %v477, %v476
    %v552 = vpack.c.b16 %v479, %v478
    %v553 = vpack.c.b16 %v481, %v480
    %v554 = vpack.c.b16 %v483, %v482
    %v555 = vpack.c.b16 %v485, %v484
    %v556 = vpack.c.b16 %v487, %v486
    %v557 = vpack.c.b16 %v489, %v488
    %v558 = vpack.c.b16 %v491, %v490
    %v559 = vpack.c.b16 %v493, %v492
    %v560 = vpack.c.b16 %v495, %v494
    %v561 = vpack.c.b16 %v497, %v496
    %626 = vmatprep.subr.bf16.mxu0 0
    %627 = vmatpush1.bf16.msra.mxu0 %v498
    %628 = vmatprep.subr.bf16.mxu0 0
    %629 = vmatpush1.bf16.msra.mxu0 %v499
    %630 = vmatprep.subr.bf16.mxu0 0
    %631 = vmatpush1.bf16.msra.mxu0 %v500
    %632 = vmatprep.subr.bf16.mxu0 0
    %633 = vmatpush1.bf16.msra.mxu0 %v501
    %634 = vmatprep.subr.bf16.mxu0 0
    %635 = vmatpush1.bf16.msra.mxu0 %v502
    %636 = vmatprep.subr.bf16.mxu0 0
    %637 = vmatpush1.bf16.msra.mxu0 %v503
    %638 = vmatprep.subr.bf16.mxu0 0
    %639 = vmatpush1.bf16.msra.mxu0 %v504
    %640 = vmatprep.subr.bf16.mxu0 0
    %641 = vmatpush1.bf16.msra.mxu0 %v505
    %642 = vmatprep.subr.bf16.mxu0 0
    %643 = vmatpush1.bf16.msra.mxu0 %v506
    %644 = vmatprep.subr.bf16.mxu0 0
    %645 = vmatpush1.bf16.msra.mxu0 %v507
    %646 = vmatprep.subr.bf16.mxu0 0
    %647 = vmatpush1.bf16.msra.mxu0 %v508
    %648 = vmatprep.subr.bf16.mxu0 0
    %649 = vmatpush1.bf16.msra.mxu0 %v509
    %650 = vmatprep.subr.bf16.mxu0 0
    %651 = vmatpush1.bf16.msra.mxu0 %v510
    %652 = vmatprep.subr.bf16.mxu0 0
    %653 = vmatpush1.bf16.msra.mxu0 %v511
    %654 = vmatprep.subr.bf16.mxu0 0
    %655 = vmatpush1.bf16.msra.mxu0 %v512
    %656 = vmatprep.subr.bf16.mxu0 0
    %657 = vmatpush1.bf16.msra.mxu0 %v513
    %658 = vmatprep.mubr.bf16.mxu0 %v227
    %659 = vmatmul.mubr.bf16.gmra.mrb[0].mxu0 %v226
    %v660 = vpop.f32.mrb[0].mxu0
    %v661 = vadd.f32 0.0, %v660
    %v662 = vpop.f32.mrb[0].mxu0
    %v663 = vpop.f32.mrb[0].mxu0
    %v664 = vadd.f32 0.0, %v663
    %v665 = vpop.f32.mrb[0].mxu0
    %666 = vdwg.mxu0
    %667 = vmatprep.subr.bf16.mxu0 0
    %668 = vmatpush1.bf16.msra.mxu0 %v514
    %669 = vmatprep.subr.bf16.mxu0 0
    %670 = vmatpush1.bf16.msra.mxu0 %v515
    %671 = vmatprep.subr.bf16.mxu0 0
    %672 = vmatpush1.bf16.msra.mxu0 %v516
    %673 = vmatprep.subr.bf16.mxu0 0
    %674 = vmatpush1.bf16.msra.mxu0 %v517
    %675 = vmatprep.subr.bf16.mxu0 0
    %676 = vmatpush1.bf16.msra.mxu0 %v518
    %677 = vmatprep.subr.bf16.mxu0 0
    %678 = vmatpush1.bf16.msra.mxu0 %v519
    %679 = vmatprep.subr.bf16.mxu0 0
    %680 = vmatpush1.bf16.msra.mxu0 %v520
    %681 = vmatprep.subr.bf16.mxu0 0
    %682 = vmatpush1.bf16.msra.mxu0 %v521
    %683 = vmatprep.subr.bf16.mxu0 0
    %684 = vmatpush1.bf16.msra.mxu0 %v522
    %685 = vmatprep.subr.bf16.mxu0 0
    %686 = vmatpush1.bf16.msra.mxu0 %v523
    %687 = vmatprep.subr.bf16.mxu0 0
    %688 = vmatpush1.bf16.msra.mxu0 %v524
    %689 = vmatprep.subr.bf16.mxu0 0
    %690 = vmatpush1.bf16.msra.mxu0 %v525
    %691 = vmatprep.subr.bf16.mxu0 0
    %692 = vmatpush1.bf16.msra.mxu0 %v526
    %693 = vmatprep.subr.bf16.mxu0 0
    %694 = vmatpush1.bf16.msra.mxu0 %v527
    %695 = vmatprep.subr.bf16.mxu0 0
    %696 = vmatpush1.bf16.msra.mxu0 %v528
    %697 = vmatprep.subr.bf16.mxu0 0
    %698 = vmatpush1.bf16.msra.mxu0 %v529
    %699 = vmatprep.mubr.bf16.mxu0 %v229
    %700 = vmatmul.mubr.bf16.gmra.mrb[0].mxu0 %v228
    %v701 = vpop.f32.mrb[0].mxu0
    %v702 = vadd.f32 %v661, %v701
    %v703 = vpop.f32.mrb[0].mxu0
    %v704 = vpop.f32.mrb[0].mxu0
    %v705 = vadd.f32 %v664, %v704
    %v706 = vpop.f32.mrb[0].mxu0
    %707 = vdwg.mxu0
    %708 = vmatprep.subr.bf16.mxu0 0
    %709 = vmatpush1.bf16.msra.mxu0 %v530
    %710 = vmatprep.subr.bf16.mxu0 0
    %711 = vmatpush1.bf16.msra.mxu0 %v531
    %712 = vmatprep.subr.bf16.mxu0 0
    %713 = vmatpush1.bf16.msra.mxu0 %v532
    %714 = vmatprep.subr.bf16.mxu0 0
    %715 = vmatpush1.bf16.msra.mxu0 %v533
    %716 = vmatprep.subr.bf16.mxu0 0
    %717 = vmatpush1.bf16.msra.mxu0 %v534
    %718 = vmatprep.subr.bf16.mxu0 0
    %719 = vmatpush1.bf16.msra.mxu0 %v535
    %720 = vmatprep.subr.bf16.mxu0 0
    %721 = vmatpush1.bf16.msra.mxu0 %v536
    %722 = vmatprep.subr.bf16.mxu0 0
    %723 = vmatpush1.bf16.msra.mxu0 %v537
    %724 = vmatprep.subr.bf16.mxu0 0
    %725 = vmatpush1.bf16.msra.mxu0 %v538
    %726 = vmatprep.subr.bf16.mxu0 0
    %727 = vmatpush1.bf16.msra.mxu0 %v539
    %728 = vmatprep.subr.bf16.mxu0 0
    %729 = vmatpush1.bf16.msra.mxu0 %v540
    %730 = vmatprep.subr.bf16.mxu0 0
    %731 = vmatpush1.bf16.msra.mxu0 %v541
    %732 = vmatprep.subr.bf16.mxu0 0
    %733 = vmatpush1.bf16.msra.mxu0 %v542
    %734 = vmatprep.subr.bf16.mxu0 0
    %735 = vmatpush1.bf16.msra.mxu0 %v543
    %736 = vmatprep.subr.bf16.mxu0 0
    %737 = vmatpush1.bf16.msra.mxu0 %v544
    %738 = vmatprep.subr.bf16.mxu0 0
    %739 = vmatpush1.bf16.msra.mxu0 %v545
    %740 = vmatprep.mubr.bf16.mxu0 %v231
    %741 = vmatmul.mubr.bf16.gmra.mrb[0].mxu0 %v230
    %v742 = vpop.f32.mrb[0].mxu0
    %v743 = vadd.f32 %v702, %v742
    %v744 = vpop.f32.mrb[0].mxu0
    %v745 = vpop.f32.mrb[0].mxu0
    %v746 = vadd.f32 %v705, %v745
    %v747 = vpop.f32.mrb[0].mxu0
    %748 = vdwg.mxu0
    %749 = vmatprep.subr.bf16.mxu0 0
    %750 = vmatpush1.bf16.msra.mxu0 %v546
    %751 = vmatprep.subr.bf16.mxu0 0
    %752 = vmatpush1.bf16.msra.mxu0 %v547
    %753 = vmatprep.subr.bf16.mxu0 0
    %754 = vmatpush1.bf16.msra.mxu0 %v548
    %755 = vmatprep.subr.bf16.mxu0 0
    %756 = vmatpush1.bf16.msra.mxu0 %v549
    %757 = vmatprep.subr.bf16.mxu0 0
    %758 = vmatpush1.bf16.msra.mxu0 %v550
    %759 = vmatprep.subr.bf16.mxu0 0
    %760 = vmatpush1.bf16.msra.mxu0 %v551
    %761 = vmatprep.subr.bf16.mxu0 0
    %762 = vmatpush1.bf16.msra.mxu0 %v552
    %763 = vmatprep.subr.bf16.mxu0 0
    %764 = vmatpush1.bf16.msra.mxu0 %v553
    %765 = vmatprep.subr.bf16.mxu0 0
    %766 = vmatpush1.bf16.msra.mxu0 %v554
    %767 = vmatprep.subr.bf16.mxu0 0
    %768 = vmatpush1.bf16.msra.mxu0 %v555
    %769 = vmatprep.subr.bf16.mxu0 0
    %770 = vmatpush1.bf16.msra.mxu0 %v556
    %771 = vmatprep.subr.bf16.mxu0 0
    %772 = vmatpush1.bf16.msra.mxu0 %v557
    %773 = vmatprep.subr.bf16.mxu0 0
    %774 = vmatpush1.bf16.msra.mxu0 %v558
    %775 = vmatprep.subr.bf16.mxu0 0
    %776 = vmatpush1.bf16.msra.mxu0 %v559
    %777 = vmatprep.subr.bf16.mxu0 0
    %778 = vmatpush1.bf16.msra.mxu0 %v560
    %779 = vmatprep.subr.bf16.mxu0 0
    %780 = vmatpush1.bf16.msra.mxu0 %v561
    %781 = vmatprep.mubr.bf16.mxu0 %v233
    %782 = vmatmul.mubr.bf16.gmra.mrb[0].mxu0 %v232
    %v783 = vpop.f32.mrb[0].mxu0
    %v784 = vadd.f32 %v743, %v783
    %v785 = vpop.f32.mrb[0].mxu0
    %v786 = vpop.f32.mrb[0].mxu0
    %v787 = vadd.f32 %v746, %v786
    %v788 = vpop.f32.mrb[0].mxu0
    %789 = vdwg.mxu0
    %p790 = scmp.eq.s32.totalorder 0, 0
    // Predicated region
    $region38: #{tpu_custom_call.1} parent=1 // pred_check
      %p791 = pneg %p790
    $region39: #{tpu_custom_call.1} parent=1 // pred_check_branch
      %793 = sbr.rel (%p791) target = $region41
    $region40: #{tpu_custom_call.1} parent=1 // pred_region
      %794 = vst [vmem:[#allocation2] sm:$0xff] %v784
      %795 = vst [vmem:[#allocation2 + $0x8] sm:$0xff] %v787
    $region41: #{tpu_custom_call.1} parent=1 // pred_fallthru
      _
    %p796 = scmp.gt.s32.totalorder 0, 0
    // Predicated region
    $region42: #{tpu_custom_call.1} parent=1 // pred_check
      %p797 = pneg %p796
    $region43: #{tpu_custom_call.1} parent=1 // pred_check_branch
      %799 = sbr.rel (%p797) target = $region45
    $region44: #{tpu_custom_call.1} parent=1 // pred_region
      %v800 = vld [vmem:[#allocation2] sm:$0xff]
      %v801 = vld [vmem:[#allocation2 + $0x8] sm:$0xff]
      %v802 = vadd.f32 %v800, %v784
      %v803 = vadd.f32 %v801, %v787
      %804 = vst [vmem:[#allocation2] sm:$0xff] %v802
      %805 = vst [vmem:[#allocation2 + $0x8] sm:$0xff] %v803
    $region45: #{tpu_custom_call.1} parent=1 // pred_fallthru
      _
    // Predicated region
    $region46: #{tpu_custom_call.1} parent=1 // pred_check
      %p806 = pneg %p790
    $region47: #{tpu_custom_call.1} parent=1 // pred_check_branch
      %808 = sbr.rel (%p806) target = $region49
    $region48: #{tpu_custom_call.1} parent=1 // pred_region
      %v809 = vld [vmem:[#allocation2] sm:$0xff]
      %v810 = vld [vmem:[#allocation2 + $0x8] sm:$0xff]
      %v811 = vld [vmem:[%s2] sm:$0x1]
      %v813 = vlaneseq
      %v814 = vshrl.u32 %v813, 7
      %v815 = vsub.s32 0, %v814
      %v816 = vrot.slane %v811, %v815
      %v818 = vadd.f32 %v809, %v816
      %v819 = vadd.f32 %v810, %v816
      %v820 = vld [vmem:[%s3] sm:$0xff]
      %vm821 = vcmask 130048
      %v823 = vsel %vm821, %v820, 0
      %825 = vmatprep.subr.mxu0 0.0
      %826 = vmatpush1.msra.mxu0 %v818
      %827 = vmatprep.subr.mxu0 0.0
      %828 = vmatpush1.msra.mxu0 %v819
      %829 = vmatprep.subr.mxu0 0.0
      %830 = vmatpush1.msra.mxu0 0.0
      %831 = vmatprep.subr.mxu0 0.0
      %832 = vmatpush1.msra.mxu0 0.0
      %833 = vmatprep.subr.mxu0 0.0
      %834 = vmatpush1.msra.mxu0 0.0
      %835 = vmatprep.subr.mxu0 0.0
      %836 = vmatpush1.msra.mxu0 0.0
      %837 = vmatprep.subr.mxu0 0.0
      %838 = vmatpush1.msra.mxu0 0.0
      %839 = vmatprep.subr.mxu0 0.0
      %840 = vmatpush1.msra.mxu0 0.0
      %841 = vmatprep.subr.mxu0 0.0
      %842 = vmatpush1.msra.mxu0 0.0
      %843 = vmatprep.subr.mxu0 0.0
      %844 = vmatpush1.msra.mxu0 0.0
      %845 = vmatprep.subr.mxu0 0.0
      %846 = vmatpush1.msra.mxu0 0.0
      %847 = vmatprep.subr.mxu0 0.0
      %848 = vmatpush1.msra.mxu0 0.0
      %849 = vmatprep.subr.mxu0 0.0
      %850 = vmatpush1.msra.mxu0 0.0
      %851 = vmatprep.subr.mxu0 0.0
      %852 = vmatpush1.msra.mxu0 0.0
      %853 = vmatprep.subr.mxu0 0.0
      %854 = vmatpush1.msra.mxu0 0.0
      %855 = vmatprep.subr.mxu0 0.0
      %856 = vmatpush1.msra.mxu0 0.0
      %857 = vmatprep.subr.mxu0 0.0
      %858 = vmatpush1.msra.mxu0 0.0
      %859 = vmatprep.subr.mxu0 0.0
      %860 = vmatpush1.msra.mxu0 0.0
      %861 = vmatprep.subr.mxu0 0.0
      %862 = vmatpush1.msra.mxu0 0.0
      %863 = vmatprep.subr.mxu0 0.0
      %864 = vmatpush1.msra.mxu0 0.0
      %865 = vmatprep.subr.mxu0 0.0
      %866 = vmatpush1.msra.mxu0 0.0
      %867 = vmatprep.subr.mxu0 0.0
      %868 = vmatpush1.msra.mxu0 0.0
      %869 = vmatprep.subr.mxu0 0.0
      %870 = vmatpush1.msra.mxu0 0.0
      %871 = vmatprep.subr.mxu0 0.0
      %872 = vmatpush1.msra.mxu0 0.0
      %873 = vmatprep.subr.mxu0 0.0
      %874 = vmatpush1.msra.mxu0 0.0
      %875 = vmatprep.subr.mxu0 0.0
      %876 = vmatpush1.msra.mxu0 0.0
      %877 = vmatprep.subr.mxu0 0.0
      %878 = vmatpush1.msra.mxu0 0.0
      %879 = vmatprep.subr.mxu0 0.0
      %880 = vmatpush1.msra.mxu0 0.0
      %881 = vmatprep.subr.mxu0 0.0
      %882 = vmatpush1.msra.mxu0 0.0
      %883 = vmatprep.subr.mxu0 0.0
      %884 = vmatpush1.msra.mxu0 0.0
      %885 = vmatprep.subr.mxu0 0.0
      %886 = vmatpush1.msra.mxu0 0.0
      %887 = vmatprep.subr.mxu0 0.0
      %888 = vmatpush1.msra.mxu0 0.0
      %889 = vmatprep.mubr.f32.mxu0 0.0
      %890 = vmatmul.mubr.f32.gmra.mrb[0].mxu0 %v823
      %v891 = vpop.f32.mrb[0].mxu0
      %v892 = vadd.f32 0.0, %v891
      %v893 = vpop.f32.mrb[0].mxu0
      %894 = vdwg.mxu0
      %v895 = vld [vmem:[#allocation8] sm:$0xff]
      %v896 = vld [vmem:[#allocation8 + $0x8] sm:$0xff]
      %v897 = vld [vmem:[#allocation8 + $0x10] sm:$0xff]
      %v898 = vld [vmem:[#allocation8 + $0x18] sm:$0xff]
      %v899 = vld [vmem:[#allocation8 + $0x20] sm:$0xff]
      %v900 = vld [vmem:[#allocation8 + $0x28] sm:$0xff]
      %v901 = vld [vmem:[#allocation8 + $0x30] sm:$0xff]
      %v902 = vld [vmem:[#allocation8 + $0x38] sm:$0xff]
      %v903 = vld [vmem:[#allocation8 + $0x40] sm:$0xff]
      %v904 = vld [vmem:[#allocation8 + $0x48] sm:$0xff]
      %v905 = vld [vmem:[#allocation8 + $0x50] sm:$0xff]
      %v906 = vld [vmem:[#allocation8 + $0x58] sm:$0xff]
      %v907 = vld [vmem:[#allocation8 + $0x60] sm:$0xff]
      %v908 = vld [vmem:[#allocation8 + $0x68] sm:$0xff]
      %v909 = vld [vmem:[#allocation8 + $0x70] sm:$0xff]
      %v910 = vld [vmem:[#allocation8 + $0x78] sm:$0xff]
      %p911 = scmp.eq.s32.totalorder 0, 0
      %s912 = scalar_select %p911, 1, 0
      %s913 = scvt.s32.f32 %s912
      %v914 = vld [vmem:[%s5] sm:$0x1]
      %v915 = vstv %s913
      %v916 = vmul.f32 %v915, %v914
      %v918 = vlaneseq
      %v919 = vshrl.u32 %v918, 7
      %v920 = vsub.s32 0, %v919
      %v921 = vrot.slane %v916, %v920
      %923 = vmatprep.subr.mxu0 0.0
      %924 = vmatpush1.msra.mxu0 %v895
      %925 = vmatprep.subr.mxu0 0.0
      %926 = vmatpush1.msra.mxu0 %v896
      %927 = vmatprep.subr.mxu0 0.0
      %928 = vmatpush1.msra.mxu0 %v897
      %929 = vmatprep.subr.mxu0 0.0
      %930 = vmatpush1.msra.mxu0 %v898
      %931 = vmatprep.subr.mxu0 0.0
      %932 = vmatpush1.msra.mxu0 %v899
      %933 = vmatprep.subr.mxu0 0.0
      %934 = vmatpush1.msra.mxu0 %v900
      %935 = vmatprep.subr.mxu0 0.0
      %936 = vmatpush1.msra.mxu0 %v901
      %937 = vmatprep.subr.mxu0 0.0
      %938 = vmatpush1.msra.mxu0 %v902
      %939 = vmatprep.subr.mxu0 0.0
      %940 = vmatpush1.msra.mxu0 %v903
      %941 = vmatprep.subr.mxu0 0.0
      %942 = vmatpush1.msra.mxu0 %v904
      %943 = vmatprep.subr.mxu0 0.0
      %944 = vmatpush1.msra.mxu0 %v905
      %945 = vmatprep.subr.mxu0 0.0
      %946 = vmatpush1.msra.mxu0 %v906
      %947 = vmatprep.subr.mxu0 0.0
      %948 = vmatpush1.msra.mxu0 %v907
      %949 = vmatprep.subr.mxu0 0.0
      %950 = vmatpush1.msra.mxu0 %v908
      %951 = vmatprep.subr.mxu0 0.0
      %952 = vmatpush1.msra.mxu0 %v909
      %953 = vmatprep.subr.mxu0 0.0
      %954 = vmatpush1.msra.mxu0 %v910
      %955 = vmatprep.subr.mxu0 0.0
      %956 = vmatpush1.msra.mxu0 0.0
      %957 = vmatprep.subr.mxu0 0.0
      %958 = vmatpush1.msra.mxu0 0.0
      %959 = vmatprep.subr.mxu0 0.0
      %960 = vmatpush1.msra.mxu0 0.0
      %961 = vmatprep.subr.mxu0 0.0
      %962 = vmatpush1.msra.mxu0 0.0
      %963 = vmatprep.subr.mxu0 0.0
      %964 = vmatpush1.msra.mxu0 0.0
      %965 = vmatprep.subr.mxu0 0.0
      %966 = vmatpush1.msra.mxu0 0.0
      %967 = vmatprep.subr.mxu0 0.0
      %968 = vmatpush1.msra.mxu0 0.0
      %969 = vmatprep.subr.mxu0 0.0
      %970 = vmatpush1.msra.mxu0 0.0
      %971 = vmatprep.subr.mxu0 0.0
      %972 = vmatpush1.msra.mxu0 0.0
      %973 = vmatprep.subr.mxu0 0.0
      %974 = vmatpush1.msra.mxu0 0.0
      %975 = vmatprep.subr.mxu0 0.0
      %976 = vmatpush1.msra.mxu0 0.0
      %977 = vmatprep.subr.mxu0 0.0
      %978 = vmatpush1.msra.mxu0 0.0
      %979 = vmatprep.subr.mxu0 0.0
      %980 = vmatpush1.msra.mxu0 0.0
      %981 = vmatprep.subr.mxu0 0.0
      %982 = vmatpush1.msra.mxu0 0.0
      %983 = vmatprep.subr.mxu0 0.0
      %984 = vmatpush1.msra.mxu0 0.0
      %985 = vmatprep.subr.mxu0 0.0
      %986 = vmatpush1.msra.mxu0 0.0
      %987 = vmatprep.mubr.f32.mxu0 0.0
      %988 = vmatmul.mubr.f32.gmra.mrb[0].mxu0 %v892
      %v989 = vpop.f32.mrb[0].mxu0
      %v990 = vadd.f32 %v921, %v989
      %v991 = vpop.f32.mrb[0].mxu0
      %992 = vdwg.mxu0
      %993 = vst [vmem:[#allocation9] sm:$0xff] %v990
    $region49: #{tpu_custom_call.1} parent=1 // pred_fallthru
      _
    // Predicated region
    $region50: #{tpu_custom_call.1} parent=1 // pred_check
      _
    $region51: #{tpu_custom_call.1} parent=1 // pred_check_branch
      %995 = sbr.rel (0) target = $region53
    $region52: #{tpu_custom_call.1} parent=1 // pred_region
      %s997 = ssub.s32 128, 128
      %998 = vsyncadd [#allocation5], %s997
      %s1000 = sshll.u32 [#allocation9], 4
      %s1001 = int_to_ptr.vmem [resolvable:$true] %s1000
      %1003 = dma.vmem_to_hbm [thread:$0]  %s1001, 128, %s6, [#allocation5]
    $region53: #{tpu_custom_call.1} parent=1 // pred_fallthru
      _
    // Predicated region
    $region54: #{tpu_custom_call.1} parent=1 // pred_check
      _
    $region55: #{tpu_custom_call.1} parent=1 // pred_check_branch
      %1005 = sbr.rel (0) target = $region57
    $region56: #{tpu_custom_call.1} parent=1 // pred_region
      %1006 = dma.done [#allocation5], 128
    $region57: #{tpu_custom_call.1} parent=1 // pred_fallthru
      _
    %1007 = vsyncpa [#allocation4], 1
    %1008 = vsyncpa [#allocation7], 1
    %1009 = vsyncpa [#allocation5], 1

</llo_original>
